<compile_context>
chip_gen: v7x
topology: tpu7x:2x2x1
jax: 0.10.0
libtpu: 0.0.40
codegen_flags: <defaults>
</compile_context>

<pallas_src>
import math

import numpy as np

import jax
import jax.numpy as jnp
from jax.experimental import pallas as pl
from jax.experimental.pallas import tpu as pltpu


_TILE_VMEM_BUDGET = 16 * 1024 * 1024   # per-step double-buffered tile budget
_VMEM_LIMIT_BYTES = 32 * 1024 * 1024   # scoped VMEM limit (safe on v5e/v6e/v7x)


# ---------------------------------------------------------------------------
# tiling helpers
# ---------------------------------------------------------------------------
def _divisors_desc(n):
    return [d for d in range(n, 0, -1) if n % d == 0]


def _row_tiles(h):
    # (8,128) rule: second-minor block dim must be a multiple of 8 or the full dim.
    cands = [d for d in _divisors_desc(h) if d == h or d % 8 == 0]
    return cands or [h]


def _pick_tiles(c, h, w, bytes_per_unit, budget):
    """Largest (cb, th) with cb | c and th a legal row tile fitting `budget`.

    `bytes_per_unit` is the per-step VMEM cost (all double-buffered blocks)
    per cb*th*w elements.
    """
    best = None
    for th in _row_tiles(h):
        for cb in _divisors_desc(c):
            if cb * th * w * bytes_per_unit <= budget:
                if best is None or cb * th > best[0] * best[1]:
                    best = (cb, th)
                break                       # largest fitting cb for this th
    if best is None:
        best = (1, _row_tiles(h)[-1])
    return best


# ---------------------------------------------------------------------------
# Haar column-expansion matrices:  E[e][j, 2j+b] carries the a=1 row of the
# Haar filter (e=0 -> L columns, e=1 -> H columns); the a=0 row only differs
# by a sign that is applied in the kernel.
# ---------------------------------------------------------------------------
def _expansion_matrices(w, dtype):
    e = np.zeros((2, w, 2 * w), np.float32)
    j = np.arange(w)
    e[0, j, 2 * j] = 0.5       # q = L:  f[1,0] = +0.5
    e[0, j, 2 * j + 1] = 0.5   #         f[1,1] = +0.5
    e[1, j, 2 * j] = -0.5      # q = H:  f[1,0] = -0.5
    e[1, j, 2 * j + 1] = 0.5   #         f[1,1] = +0.5
    return jnp.asarray(e, dtype=dtype)


# ---------------------------------------------------------------------------
# Pallas kernel 1: the four grouped 2x2 / stride-2 transposed convolutions.
# One grid step = one (batch, channel-block, row-block, sub-band).
# ---------------------------------------------------------------------------
def _unpool_kernel(e_ref, ll_ref, lh_ref, hl_ref, hh_ref, o_ref):
    s = pl.program_id(3)
    _, cb, th, w = ll_ref.shape
    w2 = 2 * w

    def emit(sub_idx, x_ref, e_idx, row0_sign):
        @pl.when(s == sub_idx)
        def _():
            x = x_ref[0].reshape(cb * th, w)                       # (cb*th, W)
            y = jnp.dot(x, e_ref[e_idx],
                        preferred_element_type=jnp.float32)        # (cb*th, 2W)
            y = y.reshape(cb, th, w2)
            # lane halves of the (H, 4W) output view:
            #   [2W:4W) -> output row 2i+1 ; [0:2W) -> output row 2i
            o_ref[0, :, :, w2:] = y.astype(o_ref.dtype)
            o_ref[0, :, :, :w2] = (row0_sign * y).astype(o_ref.dtype)

    # channel order must match torch.cat([LL, LH, HL, HH, original], dim=1)
    emit(0, ll_ref, 0, 1.0)    # LL: rows L, cols L
    emit(1, lh_ref, 1, 1.0)    # LH: rows L, cols H
    emit(2, hl_ref, 0, -1.0)   # HL: rows H, cols L
    emit(3, hh_ref, 1, -1.0)   # HH: rows H, cols H


# ---------------------------------------------------------------------------
# Pallas kernel 2: copy `original` into the tail channels of the same buffer.
# ---------------------------------------------------------------------------
def _copy_original_kernel(src_ref, _aliased_hbm_ref, o_ref):
    o_ref[...] = src_ref[...]


# ---------------------------------------------------------------------------
# WaveUnpool forward
# ---------------------------------------------------------------------------
def wave_unpool(ll, lh, hl, hh, original):
    """Returns cat([LL_up, LH_up, HL_up, HH_up, original], channel) in NCHW."""
    B, C, H, W = ll.shape
    assert lh.shape == (B, C, H, W)
    assert hl.shape == (B, C, H, W)
    assert hh.shape == (B, C, H, W)
    Bo, Co, Ho, Wo = original.shape
    assert Bo == B and Ho == 2 * H and Wo == 2 * W

    dtype = ll.dtype
    original = original.astype(dtype)
    Ctot = 4 * C + Co
    itemsize = np.dtype(dtype).itemsize

    e_mats = _expansion_matrices(W, dtype)

    # ----- kernel 1: four grouped transposed convs, written at their final
    # ----- channel positions of the (B, Ctot, H, 4W) output view.
    budget = max(_TILE_VMEM_BUDGET - 2 * int(e_mats.size) * itemsize, 1 << 20)
    cb, th = _pick_tiles(C, H, W, bytes_per_unit=16 * itemsize, budget=budget)
    c_blocks = C // cb
    sub_spec = pl.BlockSpec((1, cb, th, W), lambda b, c, h, s: (b, c, h, 0))

    buf = pl.pallas_call(
        _unpool_kernel,
        out_shape=jax.ShapeDtypeStruct((B, Ctot, H, 4 * W), dtype),
        grid=(B, c_blocks, H // th, 4),
        in_specs=[
            pl.BlockSpec((2, W, 2 * W), lambda b, c, h, s: (0, 0, 0)),
            sub_spec, sub_spec, sub_spec, sub_spec,
        ],
        out_specs=pl.BlockSpec(
            (1, cb, th, 4 * W),
            lambda b, c, h, s: (b, s * c_blocks + c, h, 0)),
        compiler_params=pltpu.CompilerParams(
            dimension_semantics=("parallel", "parallel", "parallel", "arbitrary"),
            vmem_limit_bytes=_VMEM_LIMIT_BYTES),
    )(e_mats, ll, lh, hl, hh)

    # ----- kernel 2: in-place placement of `original` into channels [4C, Ctot)
    # ----- of the same buffer (input_output_aliases -> no extra concat pass).
    g = math.gcd(4 * C, Co)
    cbo, th2 = _pick_tiles(g, H, W, bytes_per_unit=16 * itemsize,
                           budget=_TILE_VMEM_BUDGET)
    base_blk = (4 * C) // cbo
    orig_view = original.reshape(B, Co, H, 4 * W)

    out = pl.pallas_call(
        _copy_original_kernel,
        out_shape=jax.ShapeDtypeStruct((B, Ctot, H, 4 * W), dtype),
        grid=(B, Co // cbo, H // th2),
        in_specs=[
            pl.BlockSpec((1, cbo, th2, 4 * W), lambda b, c, h: (b, c, h, 0)),
            pl.BlockSpec(memory_space=pl.ANY),   # aliased with output; not read
        ],
        out_specs=pl.BlockSpec(
            (1, cbo, th2, 4 * W), lambda b, c, h: (b, base_blk + c, h, 0)),
        input_output_aliases={1: 0},
        compiler_params=pltpu.CompilerParams(
            dimension_semantics=("parallel", "parallel", "parallel"),
            vmem_limit_bytes=_VMEM_LIMIT_BYTES),
    )(orig_view, buf)

    # (B, Ctot, H, 4W) -> (B, Ctot, 2H, 2W): pure metadata reshape (no copy).
    return out.reshape(B, Ctot, 2 * H, 2 * W)


# ---------------------------------------------------------------------------
# Pure-JAX reference (mirrors the PyTorch module) for validation.
# ---------------------------------------------------------------------------
def _reference(ll, lh, hl, hh, original):
    k = 1.0 / np.sqrt(2.0)
    L = jnp.asarray([k, k], jnp.float32)
    Hf = jnp.asarray([-k, k], jnp.float32)
    filts = (jnp.outer(L, L), jnp.outer(L, Hf), jnp.outer(Hf, L), jnp.outer(Hf, Hf))
    ups = []
    for x, f in zip((ll, lh, hl, hh), filts):
        B, C, H, W = x.shape
        y = x[:, :, :, None, :, None] * f[None, None, None, :, None, :]
        ups.append(y.reshape(B, C, 2 * H, 2 * W))
    return jnp.concatenate(ups + [original], axis=1)


if __name__ == "__main__":
    key = jax.random.PRNGKey(0)
    kll, klh, khl, khh, ko = jax.random.split(key, 5)

    B, C, H, W = 2, 4, 16, 16
    Co = 4
    LL = jax.random.normal(kll, (B, C, H, W), jnp.float32)
    LH = jax.random.normal(klh, (B, C, H, W), jnp.float32)
    HL = jax.random.normal(khl, (B, C, H, W), jnp.float32)
    HH = jax.random.normal(khh, (B, C, H, W), jnp.float32)
    original = jax.random.normal(ko, (B, Co, 2 * H, 2 * W), jnp.float32)

    fwd = jax.jit(wave_unpool)
    out = jax.block_until_ready(fwd(LL, LH, HL, HH, original))

    assert out.shape == (B, 4 * C + Co, 2 * H, 2 * W), out.shape
    assert out.dtype == jnp.float32

    ref = _reference(LL, LH, HL, HH, original)
    max_err = float(jnp.max(jnp.abs(out - ref)))
    assert jnp.allclose(out, ref, atol=1e-5, rtol=1e-5), max_err

    print("KERNEL_OK")
</pallas_src>

<mosaic_0001>
module attributes {stable_mosaic.version = 11 : i64} {
  func.func @_copy_original_kernel(%arg0: i32, %arg1: i32, %arg2: i32, %arg3: memref<1x4x16x64xf32, #tpu.memory_space<vmem>>, %arg4: memref<2x20x16x64xf32, #tpu.memory_space<any>>, %arg5: memref<1x4x16x64xf32, #tpu.memory_space<vmem>>) attributes {dimension_semantics = [#tpu.dimension_semantics<parallel>, #tpu.dimension_semantics<parallel>, #tpu.dimension_semantics<parallel>], iteration_bounds = array<i64: 2, 1, 1>, scalar_prefetch = 0 : i64, scratch_operands = 0 : i64, tpu.core_type = #tpu.core_type<tc>, window_params = [{transform_indices = @transform_0, window_bounds = array<i64: 1, 4, 16, 64>}, {}, {transform_indices = @transform_2, window_bounds = array<i64: 1, 4, 16, 64>}]} {
    %c0 = arith.constant 0 : index
    %c0_0 = arith.constant 0 : index
    %c0_1 = arith.constant 0 : index
    %c0_2 = arith.constant 0 : index
    %0 = vector.load %arg3[%c0, %c0_0, %c0_1, %c0_2] : memref<1x4x16x64xf32, #tpu.memory_space<vmem>>, vector<1x4x16x64xf32>
    %c0_3 = arith.constant 0 : index
    %c0_4 = arith.constant 0 : index
    %c0_5 = arith.constant 0 : index
    %c0_6 = arith.constant 0 : index
    %1 = vector.load %arg5[%c0_3, %c0_4, %c0_5, %c0_6] : memref<1x4x16x64xf32, #tpu.memory_space<vmem>>, vector<1x4x16x64xf32>
    tpu.vector_store %arg5[%c0_3, %c0_4, %c0_5, %c0_6], %0 {strides = array<i32>} : memref<1x4x16x64xf32, #tpu.memory_space<vmem>>, vector<1x4x16x64xf32>,
    return
  }
  func.func @transform_0(%arg0: i32, %arg1: i32, %arg2: i32) -> (i32, i32, i32, i32) {
    %c0_i32 = arith.constant 0 : i32
    %c0_i32_0 = arith.constant 0 : i32
    return %arg0, %arg1, %arg2, %c0_i32 : i32, i32, i32, i32
  }
  func.func @transform_2(%arg0: i32, %arg1: i32, %arg2: i32) -> (i32, i32, i32, i32) {
    %c4_i32 = arith.constant 4 : i32
    %0 = arith.addi %c4_i32, %arg1 : i32
    %c0_i32 = arith.constant 0 : i32
    %c0_i32_0 = arith.constant 0 : i32
    return %arg0, %0, %arg2, %c0_i32 : i32, i32, i32, i32
  }
}

module attributes {stable_mosaic.version = 11 : i64} {
  func.func @_unpool_kernel(%arg0: i32, %arg1: i32, %arg2: i32, %arg3: i32, %arg4: memref<2x16x32xf32, #tpu.memory_space<vmem>>, %arg5: memref<1x4x16x16xf32, #tpu.memory_space<vmem>>, %arg6: memref<1x4x16x16xf32, #tpu.memory_space<vmem>>, %arg7: memref<1x4x16x16xf32, #tpu.memory_space<vmem>>, %arg8: memref<1x4x16x16xf32, #tpu.memory_space<vmem>>, %arg9: memref<1x4x16x64xf32, #tpu.memory_space<vmem>>) attributes {dimension_semantics = [#tpu.dimension_semantics<parallel>, #tpu.dimension_semantics<parallel>, #tpu.dimension_semantics<parallel>, #tpu.dimension_semantics<arbitrary>], iteration_bounds = array<i64: 2, 1, 1, 4>, scalar_prefetch = 0 : i64, scratch_operands = 0 : i64, tpu.core_type = #tpu.core_type<tc>, window_params = [{pipeline_mode = #tpu.pipeline_mode<synchronous>, transform_indices = @transform_0, window_bounds = array<i64: 2, 16, 32>}, {transform_indices = @transform_1, window_bounds = array<i64: 1, 4, 16, 16>}, {transform_indices = @transform_2, window_bounds = array<i64: 1, 4, 16, 16>}, {transform_indices = @transform_3, window_bounds = array<i64: 1, 4, 16, 16>}, {transform_indices = @transform_4, window_bounds = array<i64: 1, 4, 16, 16>}, {transform_indices = @transform_5, window_bounds = array<i64: 1, 4, 16, 64>}]} {
    %c0_i32 = arith.constant 0 : i32
    %0 = arith.cmpi eq, %arg3, %c0_i32 : i32
    %1 = arith.extui %0 : i1 to i32
    %c0_i32_0 = arith.constant 0 : i32
    %2 = arith.cmpi ne, %1, %c0_i32_0 : i32
    scf.if %2 {
      %c0 = arith.constant 0 : index
      %c0_4 = arith.constant 0 : index
      %c0_5 = arith.constant 0 : index
      %c0_6 = arith.constant 0 : index
      %12 = vector.load %arg5[%c0, %c0_4, %c0_5, %c0_6] : memref<1x4x16x16xf32, #tpu.memory_space<vmem>>, vector<1x4x16x16xf32>
      %13 = vector.shape_cast %12 : vector<1x4x16x16xf32> to vector<4x16x16xf32>
      %14 = vector.shape_cast %13 : vector<4x16x16xf32> to vector<64x16xf32>
      %c0_7 = arith.constant 0 : index
      %c0_8 = arith.constant 0 : index
      %c0_9 = arith.constant 0 : index
      %15 = vector.load %arg4[%c0_7, %c0_8, %c0_9] : memref<2x16x32xf32, #tpu.memory_space<vmem>>, vector<1x16x32xf32>
      %16 = vector.shape_cast %15 : vector<1x16x32xf32> to vector<16x32xf32>
      %cst = arith.constant dense<0.000000e+00> : vector<64x32xf32>
      %17 = tpu.matmul %14, %16, %cst {dimension_numbers = #tpu.dot_dimension_numbers<[1], [0], [0], [1], [0, 0, 1, 1], [], []>} : vector<64x16xf32>, vector<16x32xf32>, vector<64x32xf32> -> vector<64x32xf32>
      %18 = vector.shape_cast %17 : vector<64x32xf32> to vector<4x16x32xf32>
      %c0_10 = arith.constant 0 : index
      %c0_11 = arith.constant 0 : index
      %c0_12 = arith.constant 0 : index
      %c32 = arith.constant 32 : index
      %19 = vector.load %arg9[%c0_10, %c0_11, %c0_12, %c32] : memref<1x4x16x64xf32, #tpu.memory_space<vmem>>, vector<1x4x16x32xf32>
      %20 = vector.shape_cast %19 : vector<1x4x16x32xf32> to vector<4x16x32xf32>
      %21 = vector.shape_cast %18 : vector<4x16x32xf32> to vector<1x4x16x32xf32>
      tpu.vector_store %arg9[%c0_10, %c0_11, %c0_12, %c32], %21 {strides = array<i32>} : memref<1x4x16x64xf32, #tpu.memory_space<vmem>>, vector<1x4x16x32xf32>,
      %cst_13 = arith.constant 1.000000e+00 : f32
      %22 = vector.broadcast %cst_13 : f32 to vector<4x16x32xf32>
      %23 = arith.mulf %22, %18 : vector<4x16x32xf32>
      %c0_14 = arith.constant 0 : index
      %c0_15 = arith.constant 0 : index
      %c0_16 = arith.constant 0 : index
      %c0_17 = arith.constant 0 : index
      %24 = vector.load %arg9[%c0_14, %c0_15, %c0_16, %c0_17] : memref<1x4x16x64xf32, #tpu.memory_space<vmem>>, vector<1x4x16x32xf32>
      %25 = vector.shape_cast %24 : vector<1x4x16x32xf32> to vector<4x16x32xf32>
      %26 = vector.shape_cast %23 : vector<4x16x32xf32> to vector<1x4x16x32xf32>
      tpu.vector_store %arg9[%c0_14, %c0_15, %c0_16, %c0_17], %26 {strides = array<i32>} : memref<1x4x16x64xf32, #tpu.memory_space<vmem>>, vector<1x4x16x32xf32>,
    } else {
    }
    %c1_i32 = arith.constant 1 : i32
    %3 = arith.cmpi eq, %arg3, %c1_i32 : i32
    %4 = arith.extui %3 : i1 to i32
    %c0_i32_1 = arith.constant 0 : i32
    %5 = arith.cmpi ne, %4, %c0_i32_1 : i32
    scf.if %5 {
      %c0 = arith.constant 0 : index
      %c0_4 = arith.constant 0 : index
      %c0_5 = arith.constant 0 : index
      %c0_6 = arith.constant 0 : index
      %12 = vector.load %arg6[%c0, %c0_4, %c0_5, %c0_6] : memref<1x4x16x16xf32, #tpu.memory_space<vmem>>, vector<1x4x16x16xf32>
      %13 = vector.shape_cast %12 : vector<1x4x16x16xf32> to vector<4x16x16xf32>
      %14 = vector.shape_cast %13 : vector<4x16x16xf32> to vector<64x16xf32>
      %c1 = arith.constant 1 : index
      %c0_7 = arith.constant 0 : index
      %c0_8 = arith.constant 0 : index
      %15 = vector.load %arg4[%c1, %c0_7, %c0_8] : memref<2x16x32xf32, #tpu.memory_space<vmem>>, vector<1x16x32xf32>
      %16 = vector.shape_cast %15 : vector<1x16x32xf32> to vector<16x32xf32>
      %cst = arith.constant dense<0.000000e+00> : vector<64x32xf32>
      %17 = tpu.matmul %14, %16, %cst {dimension_numbers = #tpu.dot_dimension_numbers<[1], [0], [0], [1], [0, 0, 1, 1], [], []>} : vector<64x16xf32>, vector<16x32xf32>, vector<64x32xf32> -> vector<64x32xf32>
      %18 = vector.shape_cast %17 : vector<64x32xf32> to vector<4x16x32xf32>
      %c0_9 = arith.constant 0 : index
      %c0_10 = arith.constant 0 : index
      %c0_11 = arith.constant 0 : index
      %c32 = arith.constant 32 : index
      %19 = vector.load %arg9[%c0_9, %c0_10, %c0_11, %c32] : memref<1x4x16x64xf32, #tpu.memory_space<vmem>>, vector<1x4x16x32xf32>
      %20 = vector.shape_cast %19 : vector<1x4x16x32xf32> to vector<4x16x32xf32>
      %21 = vector.shape_cast %18 : vector<4x16x32xf32> to vector<1x4x16x32xf32>
      tpu.vector_store %arg9[%c0_9, %c0_10, %c0_11, %c32], %21 {strides = array<i32>} : memref<1x4x16x64xf32, #tpu.memory_space<vmem>>, vector<1x4x16x32xf32>,
      %cst_12 = arith.constant 1.000000e+00 : f32
      %22 = vector.broadcast %cst_12 : f32 to vector<4x16x32xf32>
      %23 = arith.mulf %22, %18 : vector<4x16x32xf32>
      %c0_13 = arith.constant 0 : index
      %c0_14 = arith.constant 0 : index
      %c0_15 = arith.constant 0 : index
      %c0_16 = arith.constant 0 : index
      %24 = vector.load %arg9[%c0_13, %c0_14, %c0_15, %c0_16] : memref<1x4x16x64xf32, #tpu.memory_space<vmem>>, vector<1x4x16x32xf32>
      %25 = vector.shape_cast %24 : vector<1x4x16x32xf32> to vector<4x16x32xf32>
      %26 = vector.shape_cast %23 : vector<4x16x32xf32> to vector<1x4x16x32xf32>
      tpu.vector_store %arg9[%c0_13, %c0_14, %c0_15, %c0_16], %26 {strides = array<i32>} : memref<1x4x16x64xf32, #tpu.memory_space<vmem>>, vector<1x4x16x32xf32>,
    } else {
    }
    %c2_i32 = arith.constant 2 : i32
    %6 = arith.cmpi eq, %arg3, %c2_i32 : i32
    %7 = arith.extui %6 : i1 to i32
    %c0_i32_2 = arith.constant 0 : i32
    %8 = arith.cmpi ne, %7, %c0_i32_2 : i32
    scf.if %8 {
      %c0 = arith.constant 0 : index
      %c0_4 = arith.constant 0 : index
      %c0_5 = arith.constant 0 : index
      %c0_6 = arith.constant 0 : index
      %12 = vector.load %arg7[%c0, %c0_4, %c0_5, %c0_6] : memref<1x4x16x16xf32, #tpu.memory_space<vmem>>, vector<1x4x16x16xf32>
      %13 = vector.shape_cast %12 : vector<1x4x16x16xf32> to vector<4x16x16xf32>
      %14 = vector.shape_cast %13 : vector<4x16x16xf32> to vector<64x16xf32>
      %c0_7 = arith.constant 0 : index
      %c0_8 = arith.constant 0 : index
      %c0_9 = arith.constant 0 : index
      %15 = vector.load %arg4[%c0_7, %c0_8, %c0_9] : memref<2x16x32xf32, #tpu.memory_space<vmem>>, vector<1x16x32xf32>
      %16 = vector.shape_cast %15 : vector<1x16x32xf32> to vector<16x32xf32>
      %cst = arith.constant dense<0.000000e+00> : vector<64x32xf32>
      %17 = tpu.matmul %14, %16, %cst {dimension_numbers = #tpu.dot_dimension_numbers<[1], [0], [0], [1], [0, 0, 1, 1], [], []>} : vector<64x16xf32>, vector<16x32xf32>, vector<64x32xf32> -> vector<64x32xf32>
      %18 = vector.shape_cast %17 : vector<64x32xf32> to vector<4x16x32xf32>
      %c0_10 = arith.constant 0 : index
      %c0_11 = arith.constant 0 : index
      %c0_12 = arith.constant 0 : index
      %c32 = arith.constant 32 : index
      %19 = vector.load %arg9[%c0_10, %c0_11, %c0_12, %c32] : memref<1x4x16x64xf32, #tpu.memory_space<vmem>>, vector<1x4x16x32xf32>
      %20 = vector.shape_cast %19 : vector<1x4x16x32xf32> to vector<4x16x32xf32>
      %21 = vector.shape_cast %18 : vector<4x16x32xf32> to vector<1x4x16x32xf32>
      tpu.vector_store %arg9[%c0_10, %c0_11, %c0_12, %c32], %21 {strides = array<i32>} : memref<1x4x16x64xf32, #tpu.memory_space<vmem>>, vector<1x4x16x32xf32>,
      %cst_13 = arith.constant -1.000000e+00 : f32
      %22 = vector.broadcast %cst_13 : f32 to vector<4x16x32xf32>
      %23 = arith.mulf %22, %18 : vector<4x16x32xf32>
      %c0_14 = arith.constant 0 : index
      %c0_15 = arith.constant 0 : index
      %c0_16 = arith.constant 0 : index
      %c0_17 = arith.constant 0 : index
      %24 = vector.load %arg9[%c0_14, %c0_15, %c0_16, %c0_17] : memref<1x4x16x64xf32, #tpu.memory_space<vmem>>, vector<1x4x16x32xf32>
      %25 = vector.shape_cast %24 : vector<1x4x16x32xf32> to vector<4x16x32xf32>
      %26 = vector.shape_cast %23 : vector<4x16x32xf32> to vector<1x4x16x32xf32>
      tpu.vector_store %arg9[%c0_14, %c0_15, %c0_16, %c0_17], %26 {strides = array<i32>} : memref<1x4x16x64xf32, #tpu.memory_space<vmem>>, vector<1x4x16x32xf32>,
    } else {
    }
    %c3_i32 = arith.constant 3 : i32
    %9 = arith.cmpi eq, %arg3, %c3_i32 : i32
    %10 = arith.extui %9 : i1 to i32
    %c0_i32_3 = arith.constant 0 : i32
    %11 = arith.cmpi ne, %10, %c0_i32_3 : i32
    scf.if %11 {
      %c0 = arith.constant 0 : index
      %c0_4 = arith.constant 0 : index
      %c0_5 = arith.constant 0 : index
      %c0_6 = arith.constant 0 : index
      %12 = vector.load %arg8[%c0, %c0_4, %c0_5, %c0_6] : memref<1x4x16x16xf32, #tpu.memory_space<vmem>>, vector<1x4x16x16xf32>
      %13 = vector.shape_cast %12 : vector<1x4x16x16xf32> to vector<4x16x16xf32>
      %14 = vector.shape_cast %13 : vector<4x16x16xf32> to vector<64x16xf32>
      %c1 = arith.constant 1 : index
      %c0_7 = arith.constant 0 : index
      %c0_8 = arith.constant 0 : index
      %15 = vector.load %arg4[%c1, %c0_7, %c0_8] : memref<2x16x32xf32, #tpu.memory_space<vmem>>, vector<1x16x32xf32>
      %16 = vector.shape_cast %15 : vector<1x16x32xf32> to vector<16x32xf32>
      %cst = arith.constant dense<0.000000e+00> : vector<64x32xf32>
      %17 = tpu.matmul %14, %16, %cst {dimension_numbers = #tpu.dot_dimension_numbers<[1], [0], [0], [1], [0, 0, 1, 1], [], []>} : vector<64x16xf32>, vector<16x32xf32>, vector<64x32xf32> -> vector<64x32xf32>
      %18 = vector.shape_cast %17 : vector<64x32xf32> to vector<4x16x32xf32>
      %c0_9 = arith.constant 0 : index
      %c0_10 = arith.constant 0 : index
      %c0_11 = arith.constant 0 : index
      %c32 = arith.constant 32 : index
      %19 = vector.load %arg9[%c0_9, %c0_10, %c0_11, %c32] : memref<1x4x16x64xf32, #tpu.memory_space<vmem>>, vector<1x4x16x32xf32>
      %20 = vector.shape_cast %19 : vector<1x4x16x32xf32> to vector<4x16x32xf32>
      %21 = vector.shape_cast %18 : vector<4x16x32xf32> to vector<1x4x16x32xf32>
      tpu.vector_store %arg9[%c0_9, %c0_10, %c0_11, %c32], %21 {strides = array<i32>} : memref<1x4x16x64xf32, #tpu.memory_space<vmem>>, vector<1x4x16x32xf32>,
      %cst_12 = arith.constant -1.000000e+00 : f32
      %22 = vector.broadcast %cst_12 : f32 to vector<4x16x32xf32>
      %23 = arith.mulf %22, %18 : vector<4x16x32xf32>
      %c0_13 = arith.constant 0 : index
      %c0_14 = arith.constant 0 : index
      %c0_15 = arith.constant 0 : index
      %c0_16 = arith.constant 0 : index
      %24 = vector.load %arg9[%c0_13, %c0_14, %c0_15, %c0_16] : memref<1x4x16x64xf32, #tpu.memory_space<vmem>>, vector<1x4x16x32xf32>
      %25 = vector.shape_cast %24 : vector<1x4x16x32xf32> to vector<4x16x32xf32>
      %26 = vector.shape_cast %23 : vector<4x16x32xf32> to vector<1x4x16x32xf32>
      tpu.vector_store %arg9[%c0_13, %c0_14, %c0_15, %c0_16], %26 {strides = array<i32>} : memref<1x4x16x64xf32, #tpu.memory_space<vmem>>, vector<1x4x16x32xf32>,
    } else {
    }
    return
  }
  func.func @transform_0(%arg0: i32, %arg1: i32, %arg2: i32, %arg3: i32) -> (i32, i32, i32) {
    %c0_i32 = arith.constant 0 : i32
    %c0_i32_0 = arith.constant 0 : i32
    %c0_i32_1 = arith.constant 0 : i32
    %c0_i32_2 = arith.constant 0 : i32
    return %c0_i32, %c0_i32_0, %c0_i32_1 : i32, i32, i32
  }
  func.func @transform_1(%arg0: i32, %arg1: i32, %arg2: i32, %arg3: i32) -> (i32, i32, i32, i32) {
    %c0_i32 = arith.constant 0 : i32
    %c0_i32_0 = arith.constant 0 : i32
    return %arg0, %arg1, %arg2, %c0_i32 : i32, i32, i32, i32
  }
  func.func @transform_2(%arg0: i32, %arg1: i32, %arg2: i32, %arg3: i32) -> (i32, i32, i32, i32) {
    %c0_i32 = arith.constant 0 : i32
    %c0_i32_0 = arith.constant 0 : i32
    return %arg0, %arg1, %arg2, %c0_i32 : i32, i32, i32, i32
  }
  func.func @transform_3(%arg0: i32, %arg1: i32, %arg2: i32, %arg3: i32) -> (i32, i32, i32, i32) {
    %c0_i32 = arith.constant 0 : i32
    %c0_i32_0 = arith.constant 0 : i32
    return %arg0, %arg1, %arg2, %c0_i32 : i32, i32, i32, i32
  }
  func.func @transform_4(%arg0: i32, %arg1: i32, %arg2: i32, %arg3: i32) -> (i32, i32, i32, i32) {
    %c0_i32 = arith.constant 0 : i32
    %c0_i32_0 = arith.constant 0 : i32
    return %arg0, %arg1, %arg2, %c0_i32 : i32, i32, i32, i32
  }
  func.func @transform_5(%arg0: i32, %arg1: i32, %arg2: i32, %arg3: i32) -> (i32, i32, i32, i32) {
    %c1_i32 = arith.constant 1 : i32
    %0 = arith.muli %arg3, %c1_i32 : i32
    %1 = arith.addi %0, %arg1 : i32
    %c0_i32 = arith.constant 0 : i32
    %c0_i32_0 = arith.constant 0 : i32
    return %arg0, %1, %arg2, %c0_i32 : i32, i32, i32, i32
  }
}

</mosaic_0001>

<llo_original>
// kernel: wave_unpool.3
$region0: #{wave_unpool.3}
  #allocation0 [shape = 'u32[]', space=smem, size = 0x4, offset = 0x4, fixed_abs, tag = 'smem constant byte address 0x4 - core index']
  #allocation1 [shape = 'u32[144,128]{1,0:T(1,128)}', space=vmem, size = 0x12000, scoped, tag = 'internal scratch']
  %s0 = inlined_call_operand.vmem [shape: f32[2,4,16,64], index: 0, kind: input, shape index: {}]
  %s1 = inlined_call_operand.vmem [shape: f32[2,20,16,64], index: 1, kind: input, shape index: {}, may-alias: {1,2}]
  %s2 = inlined_call_operand.vmem [shape: f32[2,20,16,64], index: 2, kind: output, shape index: {}, may-alias: {1,2}]
  %s3 = sld [smem:[#allocation0]]
  $region37: #{wave_unpool.3} parent=0
    _
  %s5 = ssub.s32 1, %s3
  %s6 = scalar_select 0, %s5, %s3
  loop: start=0, step=1, limit=4
  $region2: #{wave_unpool.3} parent=0 // loop_pre_header
    _
  $region3: #{wave_unpool.3} parent=0 // loop_header
    %s8 = sphi 0, %s12
    %p9 = scmp.ge.s32.totalorder %s8, 4
    %s15 = sphi 0, %s34
    %s16 = sphi 0, %s30
    %s17 = sphi 0, %s26
    %s18 = sphi 0, %s15
    %s19 = sphi 0, %s16
    %s20 = sphi 0, %s17
    %s21 = sphi 0, %s18
    %s22 = sphi 0, %s19
    %s23 = sphi 0, %s20
    %s41 = sphi 0, %s43
    %s44 = sphi 0, %s41
    %s45 = sphi 0, %s44
    %s61 = sphi 0, %s45
    %s73 = sphi 0, %s75
    %s76 = sphi 0, %s73
    %s77 = sphi 0, %s76
    %s93 = sphi 0, %s77
  $region4: #{wave_unpool.3} parent=0 // loop_header_branch
    %11 = sbr.rel (%p9) target = $region8
  $region5: #{wave_unpool.3} parent=0 // loop_body
    %s13 = ssub.s32 %s8, 1
    %s14 = ssub.s32 %s8, 2
    %s24 = sadd.s32 1, %s17
    %p25 = scmp.ge.s32.totalorder %s24, 1
    %s26 = scalar_select %p25, 0, %s24
    %s27 = sadd.s32 1, %s16
    %s28 = scalar_select %p25, %s27, %s16
    %p29 = scmp.ge.s32.totalorder %s28, 1
    %s30 = scalar_select %p29, 0, %s28
    %s31 = sadd.s32 1, %s15
    %s32 = scalar_select %p29, %s31, %s15
    %p33 = scmp.ge.s32.totalorder %s32, 2
    %s34 = scalar_select %p33, 0, %s32
    %s35 = ssub.s32 %s15, %s34
    %s36 = ssub.s32 %s16, %s30
    %s37 = sor.u32 %s35, %s36
    %s38 = ssub.s32 %s17, %s26
    %s39 = sor.u32 %s37, %s38
    %p40 = scmp.eq.s32.totalorder %s39, 0
    %s42 = sadd.s32 %s41, 1
    %s43 = scalar_select %p40, %s41, %s42
    %p46 = pneg %p40
    %p47 = scmp.eq.s32.totalorder %s8, 1
    %p48 = por %p46, %p47
    %p49 = scmp.ne.s32.totalorder %s41, %s44
    %p50 = scmp.eq.s32.totalorder %s8, 0
    %p51 = por %p49, %p50
    %p52 = scmp.ne.s32.totalorder %s41, %s44
    %p53 = scmp.eq.s32.totalorder %s13, 1
    %p54 = por %p52, %p53
    %p55 = scmp.ne.s32.totalorder %s44, %s45
    %p56 = scmp.eq.s32.totalorder %s13, 0
    %p57 = por %p55, %p56
    %p58 = scmp.ne.s32.totalorder %s44, %s45
    %p59 = scmp.eq.s32.totalorder %s14, 1
    %p60 = por %p58, %p59
    %p62 = scmp.ne.s32.totalorder %s45, %s61
    %p63 = scmp.eq.s32.totalorder %s14, 0
    %p64 = por %p62, %p63
    %s65 = sadd.s32 %s16, 4
    %s66 = sadd.s32 %s30, 4
    %s67 = ssub.s32 %s15, %s34
    %s68 = ssub.s32 %s65, %s66
    %s69 = sor.u32 %s67, %s68
    %s70 = ssub.s32 %s17, %s26
    %s71 = sor.u32 %s69, %s70
    %p72 = scmp.eq.s32.totalorder %s71, 0
    %s74 = sadd.s32 %s73, 1
    %s75 = scalar_select %p72, %s73, %s74
    %p78 = pneg %p72
    %p79 = scmp.eq.s32.totalorder %s8, 1
    %p80 = por %p78, %p79
    %p81 = scmp.ne.s32.totalorder %s73, %s76
    %p82 = scmp.eq.s32.totalorder %s8, 0
    %p83 = por %p81, %p82
    %p84 = scmp.ne.s32.totalorder %s73, %s76
    %p85 = scmp.eq.s32.totalorder %s13, 1
    %p86 = por %p84, %p85
    %p87 = scmp.ne.s32.totalorder %s76, %s77
    %p88 = scmp.eq.s32.totalorder %s13, 0
    %p89 = por %p87, %p88
    %p90 = scmp.ne.s32.totalorder %s76, %s77
    %p91 = scmp.eq.s32.totalorder %s14, 1
    %p92 = por %p90, %p91
    %p94 = scmp.ne.s32.totalorder %s77, %s93
    %p95 = scmp.eq.s32.totalorder %s14, 0
    %p96 = por %p94, %p95
    %p97 = scmp.le.s32.totalorder 1, %s8
    %p98 = scmp.lt.s32.totalorder %s8, 3
    %p99 = pnand %p97, %p98
    %p100 = pneg %p99
    // Predicated region
    $region9: #{wave_unpool.3} parent=5 // pred_check
      _
    $region10: #{wave_unpool.3} parent=5 // pred_check_branch
      %102 = sbr.rel (%p99) target = $region12
    $region11: #{wave_unpool.3} parent=5 // pred_region
      %s103 = ssub.s32 %s8, 1
    $region12: #{wave_unpool.3} parent=5 // pred_fallthru
      _
    %p104 = scmp.lt.s32.totalorder %s8, 2
    // Predicated region
    $region13: #{wave_unpool.3} parent=5 // pred_check
      %p105 = pneg %p104
    $region14: #{wave_unpool.3} parent=5 // pred_check_branch
      %107 = sbr.rel (%p105) target = $region16
    $region15: #{wave_unpool.3} parent=5 // pred_region
      // Predicated region
      $region17: #{wave_unpool.3} parent=15 // pred_check
        %p108 = pneg %p51
      $region18: #{wave_unpool.3} parent=15 // pred_check_branch
        %110 = sbr.rel (%p108) target = $region20
      $region19: #{wave_unpool.3} parent=15 // pred_region
        %s111 = smul.u32 4, %s16
        %s112 = smul.u32 2, %s17
        %p113 = scmp.lt.s32.totalorder %s15, 1
        %s114 = scalar_select %p113, %s15, 1
        %p115 = scmp.lt.s32.totalorder %s111, 3
        %s116 = scalar_select %p115, %s111, 3
        %p117 = scmp.lt.s32.totalorder %s112, 1
        %s118 = scalar_select %p117, %s112, 1
        %s119 = smul.addr %s116, 2
        %s120 = sadd.s32 %s118, %s119
        %s121 = smul.addr %s114, 8
        %s122 = sadd.s32 %s120, %s121
        %s123 = smul.addr %s122, 8
        %s124 = scalar_lea.vmem %s0, %s123
        %s125 = smul.u32 4, %s16
        %s126 = smul.u32 2, %s17
      $region20: #{wave_unpool.3} parent=15 // pred_fallthru
        _
    $region16: #{wave_unpool.3} parent=5 // pred_fallthru
      _
    %p127 = scmp.le.s32.totalorder 1, %s8
    %p128 = scmp.lt.s32.totalorder %s8, 3
    %p129 = pnand %p127, %p128
    %p130 = pneg %p129
    // Predicated region
    $region21: #{wave_unpool.3} parent=5 // pred_check
      _
    $region22: #{wave_unpool.3} parent=5 // pred_check_branch
      %132 = sbr.rel (%p129) target = $region24
    $region23: #{wave_unpool.3} parent=5 // pred_region
      %s133 = ssub.s32 %s8, 1
      %s134 = smul.u32 4, %s19
      %s135 = smul.u32 2, %s20
      %p136 = scmp.lt.s32.totalorder %s18, 1
      %s137 = scalar_select %p136, %s18, 1
      %p138 = scmp.lt.s32.totalorder %s134, 3
      %s139 = scalar_select %p138, %s134, 3
      %p140 = scmp.lt.s32.totalorder %s135, 1
      %s141 = scalar_select %p140, %s135, 1
      %s142 = smul.addr %s139, 2
      %s143 = sadd.s32 %s141, %s142
      %s144 = smul.addr %s137, 8
      %s145 = sadd.s32 %s143, %s144
      %s146 = smul.addr %s145, 8
      %s147 = scalar_lea.vmem %s0, %s146
      %p148 = pneg %p57
      %p149 = pneg %p54
      %p150 = pneg %p89
      %p151 = pneg %p86
      %s152 = sadd.s32 %s19, 4
      %s153 = smul.u32 4, %s152
      %s154 = smul.u32 2, %s20
      %p155 = scmp.lt.s32.totalorder %s18, 1
      %s156 = scalar_select %p155, %s18, 1
      %p157 = scmp.lt.s32.totalorder %s153, 19
      %s158 = scalar_select %p157, %s153, 19
      %p159 = scmp.lt.s32.totalorder %s154, 1
      %s160 = scalar_select %p159, %s154, 1
      %s161 = smul.addr %s158, 2
      %s162 = sadd.s32 %s160, %s161
      %s163 = smul.addr %s156, 40
      %s164 = sadd.s32 %s162, %s163
      %s165 = smul.addr %s164, 8
      %s166 = scalar_lea.vmem %s2, %s165
      %s167 = smul.u32 4, %s19
      %s168 = smul.u32 2, %s20
      %p169 = scmp.lt.s32.totalorder %s18, 1
      %s170 = scalar_select %p169, %s18, 1
      %p171 = scmp.lt.s32.totalorder %s167, 3
      %s172 = scalar_select %p171, %s167, 3
      %p173 = scmp.lt.s32.totalorder %s168, 1
      %s174 = scalar_select %p173, %s168, 1
      %s175 = smul.addr %s172, 2
      %s176 = sadd.s32 %s174, %s175
      %s177 = smul.addr %s170, 8
      %s178 = sadd.s32 %s176, %s177
      %s179 = smul.addr %s178, 8
      %s180 = scalar_lea.vmem %s0, %s179
      %s181 = smul.u32 4, %s19
      %s182 = smul.u32 2, %s20
      %s183 = sadd.s32 %s19, 4
      %s184 = smul.u32 4, %s183
      %s185 = smul.u32 2, %s20
      %p186 = scmp.lt.s32.totalorder %s18, 1
      %s187 = scalar_select %p186, %s18, 1
      %p188 = scmp.lt.s32.totalorder %s184, 19
      %s189 = scalar_select %p188, %s184, 19
      %p190 = scmp.lt.s32.totalorder %s185, 1
      %s191 = scalar_select %p190, %s185, 1
      %s192 = smul.addr %s189, 2
      %s193 = sadd.s32 %s191, %s192
      %s194 = smul.addr %s187, 40
      %s195 = sadd.s32 %s193, %s194
      %s196 = smul.addr %s195, 8
      %s197 = scalar_lea.vmem %s2, %s196
      %s198 = sadd.s32 %s19, 4
      %s199 = smul.u32 4, %s198
      %s200 = smul.u32 2, %s20
      %v201 = vld [vmem:[%s180] sm:$0xff]
      %v202 = vld [vmem:[%s180 + $0x8] sm:$0xff]
      %v203 = vld [vmem:[%s180 + $0x10] sm:$0xff]
      %v204 = vld [vmem:[%s180 + $0x18] sm:$0xff]
      %v205 = vld [vmem:[%s180 + $0x20] sm:$0xff]
      %v206 = vld [vmem:[%s180 + $0x28] sm:$0xff]
      %v207 = vld [vmem:[%s180 + $0x30] sm:$0xff]
      %v208 = vld [vmem:[%s180 + $0x38] sm:$0xff]
      %vm209 = vcmask 523264
      %210 = vst.msk [vmem:[%s197] sm:$0xff] %vm209, %v201
      %211 = vst.msk [vmem:[%s197 + $0x8] sm:$0xff] %vm209, %v202
      %212 = vst.msk [vmem:[%s197 + $0x10] sm:$0xff] %vm209, %v203
      %213 = vst.msk [vmem:[%s197 + $0x18] sm:$0xff] %vm209, %v204
      %214 = vst.msk [vmem:[%s197 + $0x20] sm:$0xff] %vm209, %v205
      %215 = vst.msk [vmem:[%s197 + $0x28] sm:$0xff] %vm209, %v206
      %216 = vst.msk [vmem:[%s197 + $0x30] sm:$0xff] %vm209, %v207
      %217 = vst.msk [vmem:[%s197 + $0x38] sm:$0xff] %vm209, %v208
      %s218 = sadd.s32 %s19, 4
      %s219 = smul.u32 4, %s218
      %s220 = smul.u32 2, %s20
      %p221 = scmp.lt.s32.totalorder %s18, 1
      %s222 = scalar_select %p221, %s18, 1
      %p223 = scmp.lt.s32.totalorder %s219, 19
      %s224 = scalar_select %p223, %s219, 19
      %p225 = scmp.lt.s32.totalorder %s220, 1
      %s226 = scalar_select %p225, %s220, 1
      %s227 = smul.addr %s224, 2
      %s228 = sadd.s32 %s226, %s227
      %s229 = smul.addr %s222, 40
      %s230 = sadd.s32 %s228, %s229
      %s231 = smul.addr %s230, 8
      %s232 = scalar_lea.vmem %s2, %s231
      // Predicated region
      $region25: #{wave_unpool.3} parent=23 // pred_check
        %p233 = pneg %p86
      $region26: #{wave_unpool.3} parent=23 // pred_check_branch
        %235 = sbr.rel (%p233) target = $region28
      $region27: #{wave_unpool.3} parent=23 // pred_region
        %s236 = sadd.s32 %s19, 4
        %s237 = smul.u32 4, %s236
        %s238 = smul.u32 2, %s20
      $region28: #{wave_unpool.3} parent=23 // pred_fallthru
        _
    $region24: #{wave_unpool.3} parent=5 // pred_fallthru
      _
    %p239 = scmp.le.s32.totalorder 2, %s8
    // Predicated region
    $region29: #{wave_unpool.3} parent=5 // pred_check
      %p240 = pneg %p239
    $region30: #{wave_unpool.3} parent=5 // pred_check_branch
      %242 = sbr.rel (%p240) target = $region32
    $region31: #{wave_unpool.3} parent=5 // pred_region
      %s243 = ssub.s32 %s8, 2
      // Predicated region
      $region33: #{wave_unpool.3} parent=31 // pred_check
        %p244 = pneg %p92
      $region34: #{wave_unpool.3} parent=31 // pred_check_branch
        %246 = sbr.rel (%p244) target = $region36
      $region35: #{wave_unpool.3} parent=31 // pred_region
        %s247 = sadd.s32 %s22, 4
        %s248 = smul.u32 4, %s247
        %s249 = smul.u32 2, %s23
        %p250 = scmp.lt.s32.totalorder %s21, 1
        %s251 = scalar_select %p250, %s21, 1
        %p252 = scmp.lt.s32.totalorder %s248, 19
        %s253 = scalar_select %p252, %s248, 19
        %p254 = scmp.lt.s32.totalorder %s249, 1
        %s255 = scalar_select %p254, %s249, 1
        %s256 = smul.addr %s253, 2
        %s257 = sadd.s32 %s255, %s256
        %s258 = smul.addr %s251, 40
        %s259 = sadd.s32 %s257, %s258
        %s260 = smul.addr %s259, 8
        %s261 = scalar_lea.vmem %s2, %s260
      $region36: #{wave_unpool.3} parent=31 // pred_fallthru
        _
    $region32: #{wave_unpool.3} parent=5 // pred_fallthru
      _
  $region6: #{wave_unpool.3} parent=0 // loop_footer
    %s12 = sadd.s32 1, %s8
  $region7: #{wave_unpool.3} parent=0 // loop_footer_branch
    %7 = sbr.rel target = $region3
  $region8: #{wave_unpool.3} parent=0 // loop_exit
    _

// kernel: wave_unpool.2
$region0: #{wave_unpool.2}
  #allocation0 [shape = 'u32[]', space=smem, size = 0x4, offset = 0x4, fixed_abs, tag = 'smem constant byte address 0x4 - core index']
  #allocation1 [shape = 'u32[144,128]{1,0:T(1,128)}', space=vmem, size = 0x12000, scoped, tag = 'internal scratch']
  %s0 = inlined_call_operand.hbm [shape: f32[2,16,32], index: 0, kind: input, shape index: {}]
  %s1 = inlined_call_operand.vmem [shape: f32[2,4,16,16], index: 1, kind: input, shape index: {}]
  %s2 = inlined_call_operand.vmem [shape: f32[2,4,16,16], index: 2, kind: input, shape index: {}]
  %s3 = inlined_call_operand.vmem [shape: f32[2,4,16,16], index: 3, kind: input, shape index: {}]
  %s4 = inlined_call_operand.hbm [shape: f32[2,4,16,16], index: 4, kind: input, shape index: {}]
  %s5 = inlined_call_operand.vmem [shape: f32[2,20,16,64], index: 5, kind: output, shape index: {}]
  %s6 = sld [smem:[#allocation0]]
  $region77: #{wave_unpool.2} parent=0
    _
  %s8 = ssub.s32 1, %s6
  %s9 = scalar_select 0, %s8, %s6
  $region1: #{wave_unpool.2} parent=0
    #allocation2 [shape = 'u8[16384]{0}', space=vmem, size = 0x4000, scoped, tag = 'input window, operand 0, single buffered']
    #allocation3 [shape = 's32[2]{0}', space=sflag, size = 0x8, scoped, tag = 'scoped memory for wave_unpool.2']
    #allocation4 [shape = 'u8[65536]{0}', space=vmem, size = 0x10000, scoped, tag = 'input window, operand 4']
    #allocation5 [shape = 's32[2]{0}', space=sflag, size = 0x8, scoped, tag = 'scoped memory for wave_unpool.2']
    %10 = vsyncpa [#allocation3], 0
    %11 = vsyncpa [#allocation5], 0
    %s12 = scalar_lea.sflag [#allocation5], 1
    %13 = vsyncpa %s12, 0
    loop: start=0, step=1, limit=10
    $region2: #{wave_unpool.2} parent=1 // loop_pre_header
      _
    $region3: #{wave_unpool.2} parent=1 // loop_header
      %s15 = sphi 0, %s19
      %p16 = scmp.ge.s32.totalorder %s15, 10
      %s22 = sphi 0, %s48
      %s23 = sphi 0, %s44
      %s24 = sphi 0, %s40
      %s25 = sphi 0, %s36
      %s26 = sphi 0, %s22
      %s27 = sphi 0, %s23
      %s28 = sphi 0, %s24
      %s29 = sphi 0, %s25
      %s30 = sphi 0, %s26
      %s31 = sphi 0, %s27
      %s32 = sphi 0, %s28
      %s33 = sphi 0, %s29
      %s49 = sphi 0, %s49
      %s51 = sphi 0, %s49
      %s52 = sphi 0, %s51
      %s66 = sphi 0, %s52
      %s76 = sphi 0, %s78
      %s79 = sphi 0, %s76
      %s80 = sphi 0, %s79
      %s96 = sphi 0, %s80
      %s106 = sphi 0, %s108
      %s109 = sphi 0, %s106
      %s110 = sphi 0, %s109
      %s126 = sphi 0, %s110
      %s136 = sphi 0, %s138
      %s139 = sphi 0, %s136
      %s140 = sphi 0, %s139
      %s156 = sphi 0, %s140
      %s166 = sphi 0, %s168
      %s169 = sphi 0, %s166
      %s170 = sphi 0, %s169
      %s186 = sphi 0, %s170
      %s198 = sphi 0, %s200
      %s201 = sphi 0, %s198
      %s202 = sphi 0, %s201
      %s218 = sphi 0, %s202
    $region4: #{wave_unpool.2} parent=1 // loop_header_branch
      %18 = sbr.rel (%p16) target = $region8
    $region5: #{wave_unpool.2} parent=1 // loop_body
      %s20 = ssub.s32 %s15, 1
      %s21 = ssub.s32 %s15, 2
      %s34 = sadd.s32 1, %s25
      %p35 = scmp.ge.s32.totalorder %s34, 4
      %s36 = scalar_select %p35, 0, %s34
      %s37 = sadd.s32 1, %s24
      %s38 = scalar_select %p35, %s37, %s24
      %p39 = scmp.ge.s32.totalorder %s38, 1
      %s40 = scalar_select %p39, 0, %s38
      %s41 = sadd.s32 1, %s23
      %s42 = scalar_select %p39, %s41, %s23
      %p43 = scmp.ge.s32.totalorder %s42, 1
      %s44 = scalar_select %p43, 0, %s42
      %s45 = sadd.s32 1, %s22
      %s46 = scalar_select %p43, %s45, %s22
      %p47 = scmp.ge.s32.totalorder %s46, 2
      %s48 = scalar_select %p47, 0, %s46
      %s50 = sadd.s32 %s49, 1
      %p53 = scmp.eq.s32.totalorder %s15, 7
      %p54 = scmp.ne.s32.totalorder %s49, %s51
      %p55 = scmp.eq.s32.totalorder %s15, 0
      %p56 = por %p54, %p55
      %p57 = scmp.ne.s32.totalorder %s49, %s51
      %p58 = scmp.eq.s32.totalorder %s20, 7
      %p59 = por %p57, %p58
      %p60 = scmp.ne.s32.totalorder %s51, %s52
      %p61 = scmp.eq.s32.totalorder %s20, 0
      %p62 = por %p60, %p61
      %p63 = scmp.ne.s32.totalorder %s51, %s52
      %p64 = scmp.eq.s32.totalorder %s21, 7
      %p65 = por %p63, %p64
      %p67 = scmp.ne.s32.totalorder %s52, %s66
      %p68 = scmp.eq.s32.totalorder %s21, 0
      %p69 = por %p67, %p68
      %s70 = ssub.s32 %s22, %s48
      %s71 = ssub.s32 %s23, %s44
      %s72 = sor.u32 %s70, %s71
      %s73 = ssub.s32 %s24, %s40
      %s74 = sor.u32 %s72, %s73
      %p75 = scmp.eq.s32.totalorder %s74, 0
      %s77 = sadd.s32 %s76, 1
      %s78 = scalar_select %p75, %s76, %s77
      %p81 = pneg %p75
      %p82 = scmp.eq.s32.totalorder %s15, 7
      %p83 = por %p81, %p82
      %p84 = scmp.ne.s32.totalorder %s76, %s79
      %p85 = scmp.eq.s32.totalorder %s15, 0
      %p86 = por %p84, %p85
      %p87 = scmp.ne.s32.totalorder %s76, %s79
      %p88 = scmp.eq.s32.totalorder %s20, 7
      %p89 = por %p87, %p88
      %p90 = scmp.ne.s32.totalorder %s79, %s80
      %p91 = scmp.eq.s32.totalorder %s20, 0
      %p92 = por %p90, %p91
      %p93 = scmp.ne.s32.totalorder %s79, %s80
      %p94 = scmp.eq.s32.totalorder %s21, 7
      %p95 = por %p93, %p94
      %p97 = scmp.ne.s32.totalorder %s80, %s96
      %p98 = scmp.eq.s32.totalorder %s21, 0
      %p99 = por %p97, %p98
      %s100 = ssub.s32 %s22, %s48
      %s101 = ssub.s32 %s23, %s44
      %s102 = sor.u32 %s100, %s101
      %s103 = ssub.s32 %s24, %s40
      %s104 = sor.u32 %s102, %s103
      %p105 = scmp.eq.s32.totalorder %s104, 0
      %s107 = sadd.s32 %s106, 1
      %s108 = scalar_select %p105, %s106, %s107
      %p111 = pneg %p105
      %p112 = scmp.eq.s32.totalorder %s15, 7
      %p113 = por %p111, %p112
      %p114 = scmp.ne.s32.totalorder %s106, %s109
      %p115 = scmp.eq.s32.totalorder %s15, 0
      %p116 = por %p114, %p115
      %p117 = scmp.ne.s32.totalorder %s106, %s109
      %p118 = scmp.eq.s32.totalorder %s20, 7
      %p119 = por %p117, %p118
      %p120 = scmp.ne.s32.totalorder %s109, %s110
      %p121 = scmp.eq.s32.totalorder %s20, 0
      %p122 = por %p120, %p121
      %p123 = scmp.ne.s32.totalorder %s109, %s110
      %p124 = scmp.eq.s32.totalorder %s21, 7
      %p125 = por %p123, %p124
      %p127 = scmp.ne.s32.totalorder %s110, %s126
      %p128 = scmp.eq.s32.totalorder %s21, 0
      %p129 = por %p127, %p128
      %s130 = ssub.s32 %s22, %s48
      %s131 = ssub.s32 %s23, %s44
      %s132 = sor.u32 %s130, %s131
      %s133 = ssub.s32 %s24, %s40
      %s134 = sor.u32 %s132, %s133
      %p135 = scmp.eq.s32.totalorder %s134, 0
      %s137 = sadd.s32 %s136, 1
      %s138 = scalar_select %p135, %s136, %s137
      %p141 = pneg %p135
      %p142 = scmp.eq.s32.totalorder %s15, 7
      %p143 = por %p141, %p142
      %p144 = scmp.ne.s32.totalorder %s136, %s139
      %p145 = scmp.eq.s32.totalorder %s15, 0
      %p146 = por %p144, %p145
      %p147 = scmp.ne.s32.totalorder %s136, %s139
      %p148 = scmp.eq.s32.totalorder %s20, 7
      %p149 = por %p147, %p148
      %p150 = scmp.ne.s32.totalorder %s139, %s140
      %p151 = scmp.eq.s32.totalorder %s20, 0
      %p152 = por %p150, %p151
      %p153 = scmp.ne.s32.totalorder %s139, %s140
      %p154 = scmp.eq.s32.totalorder %s21, 7
      %p155 = por %p153, %p154
      %p157 = scmp.ne.s32.totalorder %s140, %s156
      %p158 = scmp.eq.s32.totalorder %s21, 0
      %p159 = por %p157, %p158
      %s160 = ssub.s32 %s22, %s48
      %s161 = ssub.s32 %s23, %s44
      %s162 = sor.u32 %s160, %s161
      %s163 = ssub.s32 %s24, %s40
      %s164 = sor.u32 %s162, %s163
      %p165 = scmp.eq.s32.totalorder %s164, 0
      %s167 = sadd.s32 %s166, 1
      %s168 = scalar_select %p165, %s166, %s167
      %p171 = pneg %p165
      %p172 = scmp.eq.s32.totalorder %s15, 7
      %p173 = por %p171, %p172
      %p174 = scmp.ne.s32.totalorder %s166, %s169
      %p175 = scmp.eq.s32.totalorder %s15, 0
      %p176 = por %p174, %p175
      %p177 = scmp.ne.s32.totalorder %s166, %s169
      %p178 = scmp.eq.s32.totalorder %s20, 7
      %p179 = por %p177, %p178
      %p180 = scmp.ne.s32.totalorder %s169, %s170
      %p181 = scmp.eq.s32.totalorder %s20, 0
      %p182 = por %p180, %p181
      %p183 = scmp.ne.s32.totalorder %s169, %s170
      %p184 = scmp.eq.s32.totalorder %s21, 7
      %p185 = por %p183, %p184
      %p187 = scmp.ne.s32.totalorder %s170, %s186
      %p188 = scmp.eq.s32.totalorder %s21, 0
      %p189 = por %p187, %p188
      %s190 = sadd.s32 %s25, %s23
      %s191 = sadd.s32 %s36, %s44
      %s192 = ssub.s32 %s22, %s48
      %s193 = ssub.s32 %s190, %s191
      %s194 = sor.u32 %s192, %s193
      %s195 = ssub.s32 %s24, %s40
      %s196 = sor.u32 %s194, %s195
      %p197 = scmp.eq.s32.totalorder %s196, 0
      %s199 = sadd.s32 %s198, 1
      %s200 = scalar_select %p197, %s198, %s199
      %p203 = pneg %p197
      %p204 = scmp.eq.s32.totalorder %s15, 7
      %p205 = por %p203, %p204
      %p206 = scmp.ne.s32.totalorder %s198, %s201
      %p207 = scmp.eq.s32.totalorder %s15, 0
      %p208 = por %p206, %p207
      %p209 = scmp.ne.s32.totalorder %s198, %s201
      %p210 = scmp.eq.s32.totalorder %s20, 7
      %p211 = por %p209, %p210
      %p212 = scmp.ne.s32.totalorder %s201, %s202
      %p213 = scmp.eq.s32.totalorder %s20, 0
      %p214 = por %p212, %p213
      %p215 = scmp.ne.s32.totalorder %s201, %s202
      %p216 = scmp.eq.s32.totalorder %s21, 7
      %p217 = por %p215, %p216
      %p219 = scmp.ne.s32.totalorder %s202, %s218
      %p220 = scmp.eq.s32.totalorder %s21, 0
      %p221 = por %p219, %p220
      %p222 = scmp.le.s32.totalorder 1, %s15
      %p223 = scmp.lt.s32.totalorder %s15, 9
      %p224 = pnand %p222, %p223
      %p225 = pneg %p224
      // Predicated region
      $region9: #{wave_unpool.2} parent=5 // pred_check
        _
      $region10: #{wave_unpool.2} parent=5 // pred_check_branch
        %227 = sbr.rel (%p224) target = $region12
      $region11: #{wave_unpool.2} parent=5 // pred_region
        %s228 = ssub.s32 %s15, 1
        // Predicated region
        $region13: #{wave_unpool.2} parent=11 // pred_check
          %p229 = pneg %p62
        $region14: #{wave_unpool.2} parent=11 // pred_check_branch
          %231 = sbr.rel (%p229) target = $region16
        $region15: #{wave_unpool.2} parent=11 // pred_region
          %s233 = ssub.s32 512, 512
          %234 = vsyncadd [#allocation3], %s233
          %s235 = sshll.u32 [#allocation2], 4
          %s236 = int_to_ptr.vmem [resolvable:$true] %s235
          %241 = dma.hbm_to_vmem [thread:$0]  %s0, 512, %s236, [#allocation3], 128, 128, 8
        $region16: #{wave_unpool.2} parent=11 // pred_fallthru
          _
      $region12: #{wave_unpool.2} parent=5 // pred_fallthru
        _
      %p242 = scmp.lt.s32.totalorder %s15, 8
      // Predicated region
      $region17: #{wave_unpool.2} parent=5 // pred_check
        %p243 = pneg %p242
      $region18: #{wave_unpool.2} parent=5 // pred_check_branch
        %245 = sbr.rel (%p243) target = $region20
      $region19: #{wave_unpool.2} parent=5 // pred_region
        // Predicated region
        $region21: #{wave_unpool.2} parent=19 // pred_check
          %p246 = pneg %p86
        $region22: #{wave_unpool.2} parent=19 // pred_check_branch
          %248 = sbr.rel (%p246) target = $region24
        $region23: #{wave_unpool.2} parent=19 // pred_region
          %s249 = smul.u32 4, %s23
          %s250 = smul.u32 2, %s24
          %p251 = scmp.lt.s32.totalorder %s22, 1
          %s252 = scalar_select %p251, %s22, 1
          %p253 = scmp.lt.s32.totalorder %s249, 3
          %s254 = scalar_select %p253, %s249, 3
          %p255 = scmp.lt.s32.totalorder %s250, 1
          %s256 = scalar_select %p255, %s250, 1
          %s257 = smul.addr %s254, 2
          %s258 = sadd.s32 %s256, %s257
          %s259 = smul.addr %s252, 8
          %s260 = sadd.s32 %s258, %s259
          %s261 = smul.addr %s260, 8
          %s262 = scalar_lea.vmem %s1, %s261
          %s263 = smul.u32 4, %s23
          %s264 = smul.u32 2, %s24
        $region24: #{wave_unpool.2} parent=19 // pred_fallthru
          _
        // Predicated region
        $region25: #{wave_unpool.2} parent=19 // pred_check
          %p265 = pneg %p116
        $region26: #{wave_unpool.2} parent=19 // pred_check_branch
          %267 = sbr.rel (%p265) target = $region28
        $region27: #{wave_unpool.2} parent=19 // pred_region
          %s268 = smul.u32 4, %s23
          %s269 = smul.u32 2, %s24
          %p270 = scmp.lt.s32.totalorder %s22, 1
          %s271 = scalar_select %p270, %s22, 1
          %p272 = scmp.lt.s32.totalorder %s268, 3
          %s273 = scalar_select %p272, %s268, 3
          %p274 = scmp.lt.s32.totalorder %s269, 1
          %s275 = scalar_select %p274, %s269, 1
          %s276 = smul.addr %s273, 2
          %s277 = sadd.s32 %s275, %s276
          %s278 = smul.addr %s271, 8
          %s279 = sadd.s32 %s277, %s278
          %s280 = smul.addr %s279, 8
          %s281 = scalar_lea.vmem %s2, %s280
          %s282 = smul.u32 4, %s23
          %s283 = smul.u32 2, %s24
        $region28: #{wave_unpool.2} parent=19 // pred_fallthru
          _
        // Predicated region
        $region29: #{wave_unpool.2} parent=19 // pred_check
          %p284 = pneg %p146
        $region30: #{wave_unpool.2} parent=19 // pred_check_branch
          %286 = sbr.rel (%p284) target = $region32
        $region31: #{wave_unpool.2} parent=19 // pred_region
          %s287 = smul.u32 4, %s23
          %s288 = smul.u32 2, %s24
          %p289 = scmp.lt.s32.totalorder %s22, 1
          %s290 = scalar_select %p289, %s22, 1
          %p291 = scmp.lt.s32.totalorder %s287, 3
          %s292 = scalar_select %p291, %s287, 3
          %p293 = scmp.lt.s32.totalorder %s288, 1
          %s294 = scalar_select %p293, %s288, 1
          %s295 = smul.addr %s292, 2
          %s296 = sadd.s32 %s294, %s295
          %s297 = smul.addr %s290, 8
          %s298 = sadd.s32 %s296, %s297
          %s299 = smul.addr %s298, 8
          %s300 = scalar_lea.vmem %s3, %s299
          %s301 = smul.u32 4, %s23
          %s302 = smul.u32 2, %s24
        $region32: #{wave_unpool.2} parent=19 // pred_fallthru
          _
        // Predicated region
        $region33: #{wave_unpool.2} parent=19 // pred_check
          %p303 = pneg %p176
        $region34: #{wave_unpool.2} parent=19 // pred_check_branch
          %305 = sbr.rel (%p303) target = $region36
        $region35: #{wave_unpool.2} parent=19 // pred_region
          %s306 = sand.u32 %s166, 1
          %s307 = scalar_lea.sflag [#allocation5], %s306
          %s308 = sand.u32 %s166, 1
          %s309 = smul.addr %s308, 64
          %s310 = scalar_lea.vmem [#allocation4], %s309
          %s311 = smul.u32 4, %s23
          %s312 = smul.u32 2, %s24
          %s314 = ssub.s32 1024, 1024
          %315 = vsyncadd %s307, %s314
          %s316 = smul.addr %s311, 2
          %s317 = sadd.s32 %s312, %s316
          %s318 = smul.addr %s22, 8
          %s319 = sadd.s32 %s317, %s318
          %s320 = smul.addr %s319, 128
          %s321 = scalar_lea.hbm %s4, %s320
          %s322 = sshll.u32 %s310, 4
          %s323 = int_to_ptr.vmem [resolvable:$true] %s322
          %328 = dma.hbm_to_vmem [thread:$0]  %s321, 1024, %s323, %s307, 128, 128, 8
        $region36: #{wave_unpool.2} parent=19 // pred_fallthru
          _
      $region20: #{wave_unpool.2} parent=5 // pred_fallthru
        _
      %p329 = scmp.le.s32.totalorder 1, %s15
      %p330 = scmp.lt.s32.totalorder %s15, 9
      %p331 = pnand %p329, %p330
      %p332 = pneg %p331
      // Predicated region
      $region37: #{wave_unpool.2} parent=5 // pred_check
        _
      $region38: #{wave_unpool.2} parent=5 // pred_check_branch
        %334 = sbr.rel (%p331) target = $region40
      $region39: #{wave_unpool.2} parent=5 // pred_region
        %s335 = ssub.s32 %s15, 1
        // Predicated region
        $region41: #{wave_unpool.2} parent=39 // pred_check
          %p336 = pneg %p62
        $region42: #{wave_unpool.2} parent=39 // pred_check_branch
          %338 = sbr.rel (%p336) target = $region44
        $region43: #{wave_unpool.2} parent=39 // pred_region
          %339 = dma.done [#allocation3], 512
        $region44: #{wave_unpool.2} parent=39 // pred_fallthru
          _
        %s340 = sand.u32 %s169, 1
        %s341 = scalar_lea.sflag [#allocation5], %s340
        %s342 = sand.u32 %s169, 1
        %s343 = smul.addr %s342, 64
        %s344 = scalar_lea.vmem [#allocation4], %s343
        // Predicated region
        $region45: #{wave_unpool.2} parent=39 // pred_check
          %p345 = pneg %p182
        $region46: #{wave_unpool.2} parent=39 // pred_check_branch
          %347 = sbr.rel (%p345) target = $region48
        $region47: #{wave_unpool.2} parent=39 // pred_region
          %348 = dma.done %s341, 1024
        $region48: #{wave_unpool.2} parent=39 // pred_fallthru
          _
        %p349 = pneg %p62
        %p350 = pneg %p59
        %s351 = smul.u32 4, %s27
        %s352 = smul.u32 2, %s28
        %p353 = scmp.lt.s32.totalorder %s26, 1
        %s354 = scalar_select %p353, %s26, 1
        %p355 = scmp.lt.s32.totalorder %s351, 3
        %s356 = scalar_select %p355, %s351, 3
        %p357 = scmp.lt.s32.totalorder %s352, 1
        %s358 = scalar_select %p357, %s352, 1
        %s359 = smul.addr %s356, 2
        %s360 = sadd.s32 %s358, %s359
        %s361 = smul.addr %s354, 8
        %s362 = sadd.s32 %s360, %s361
        %s363 = smul.addr %s362, 8
        %s364 = scalar_lea.vmem %s1, %s363
        %p365 = pneg %p92
        %p366 = pneg %p89
        %s367 = smul.u32 4, %s27
        %s368 = smul.u32 2, %s28
        %p369 = scmp.lt.s32.totalorder %s26, 1
        %s370 = scalar_select %p369, %s26, 1
        %p371 = scmp.lt.s32.totalorder %s367, 3
        %s372 = scalar_select %p371, %s367, 3
        %p373 = scmp.lt.s32.totalorder %s368, 1
        %s374 = scalar_select %p373, %s368, 1
        %s375 = smul.addr %s372, 2
        %s376 = sadd.s32 %s374, %s375
        %s377 = smul.addr %s370, 8
        %s378 = sadd.s32 %s376, %s377
        %s379 = smul.addr %s378, 8
        %s380 = scalar_lea.vmem %s2, %s379
        %p381 = pneg %p122
        %p382 = pneg %p119
        %s383 = smul.u32 4, %s27
        %s384 = smul.u32 2, %s28
        %p385 = scmp.lt.s32.totalorder %s26, 1
        %s386 = scalar_select %p385, %s26, 1
        %p387 = scmp.lt.s32.totalorder %s383, 3
        %s388 = scalar_select %p387, %s383, 3
        %p389 = scmp.lt.s32.totalorder %s384, 1
        %s390 = scalar_select %p389, %s384, 1
        %s391 = smul.addr %s388, 2
        %s392 = sadd.s32 %s390, %s391
        %s393 = smul.addr %s386, 8
        %s394 = sadd.s32 %s392, %s393
        %s395 = smul.addr %s394, 8
        %s396 = scalar_lea.vmem %s3, %s395
        %p397 = pneg %p152
        %p398 = pneg %p149
        %s399 = sand.u32 %s169, 1
        %s400 = scalar_lea.sflag [#allocation5], %s399
        %s401 = sand.u32 %s169, 1
        %s402 = smul.addr %s401, 64
        %s403 = scalar_lea.vmem [#allocation4], %s402
        %p404 = pneg %p182
        %p405 = pneg %p179
        %p406 = pneg %p214
        %p407 = pneg %p211
        %s408 = sadd.s32 %s29, %s27
        %s409 = smul.u32 4, %s408
        %s410 = smul.u32 2, %s28
        %p411 = scmp.lt.s32.totalorder %s26, 1
        %s412 = scalar_select %p411, %s26, 1
        %p413 = scmp.lt.s32.totalorder %s409, 19
        %s414 = scalar_select %p413, %s409, 19
        %p415 = scmp.lt.s32.totalorder %s410, 1
        %s416 = scalar_select %p415, %s410, 1
        %s417 = smul.addr %s414, 2
        %s418 = sadd.s32 %s416, %s417
        %s419 = smul.addr %s412, 40
        %s420 = sadd.s32 %s418, %s419
        %s421 = smul.addr %s420, 8
        %s422 = scalar_lea.vmem %s5, %s421
        %s423 = smul.u32 4, %s27
        %s424 = smul.u32 2, %s28
        %p425 = scmp.lt.s32.totalorder %s26, 1
        %s426 = scalar_select %p425, %s26, 1
        %p427 = scmp.lt.s32.totalorder %s423, 3
        %s428 = scalar_select %p427, %s423, 3
        %p429 = scmp.lt.s32.totalorder %s424, 1
        %s430 = scalar_select %p429, %s424, 1
        %s431 = smul.addr %s428, 2
        %s432 = sadd.s32 %s430, %s431
        %s433 = smul.addr %s426, 8
        %s434 = sadd.s32 %s432, %s433
        %s435 = smul.addr %s434, 8
        %s436 = scalar_lea.vmem %s1, %s435
        %s437 = smul.u32 4, %s27
        %s438 = smul.u32 2, %s28
        %s439 = smul.u32 4, %s27
        %s440 = smul.u32 2, %s28
        %p441 = scmp.lt.s32.totalorder %s26, 1
        %s442 = scalar_select %p441, %s26, 1
        %p443 = scmp.lt.s32.totalorder %s439, 3
        %s444 = scalar_select %p443, %s439, 3
        %p445 = scmp.lt.s32.totalorder %s440, 1
        %s446 = scalar_select %p445, %s440, 1
        %s447 = smul.addr %s444, 2
        %s448 = sadd.s32 %s446, %s447
        %s449 = smul.addr %s442, 8
        %s450 = sadd.s32 %s448, %s449
        %s451 = smul.addr %s450, 8
        %s452 = scalar_lea.vmem %s2, %s451
        %s453 = smul.u32 4, %s27
        %s454 = smul.u32 2, %s28
        %s455 = smul.u32 4, %s27
        %s456 = smul.u32 2, %s28
        %p457 = scmp.lt.s32.totalorder %s26, 1
        %s458 = scalar_select %p457, %s26, 1
        %p459 = scmp.lt.s32.totalorder %s455, 3
        %s460 = scalar_select %p459, %s455, 3
        %p461 = scmp.lt.s32.totalorder %s456, 1
        %s462 = scalar_select %p461, %s456, 1
        %s463 = smul.addr %s460, 2
        %s464 = sadd.s32 %s462, %s463
        %s465 = smul.addr %s458, 8
        %s466 = sadd.s32 %s464, %s465
        %s467 = smul.addr %s466, 8
        %s468 = scalar_lea.vmem %s3, %s467
        %s469 = smul.u32 4, %s27
        %s470 = smul.u32 2, %s28
        %s471 = smul.u32 4, %s27
        %s472 = smul.u32 2, %s28
        %s473 = sadd.s32 %s29, %s27
        %s474 = smul.u32 4, %s473
        %s475 = smul.u32 2, %s28
        %p476 = scmp.lt.s32.totalorder %s26, 1
        %s477 = scalar_select %p476, %s26, 1
        %p478 = scmp.lt.s32.totalorder %s474, 19
        %s479 = scalar_select %p478, %s474, 19
        %p480 = scmp.lt.s32.totalorder %s475, 1
        %s481 = scalar_select %p480, %s475, 1
        %s482 = smul.addr %s479, 2
        %s483 = sadd.s32 %s481, %s482
        %s484 = smul.addr %s477, 40
        %s485 = sadd.s32 %s483, %s484
        %s486 = smul.addr %s485, 8
        %s487 = scalar_lea.vmem %s5, %s486
        %s488 = sadd.s32 %s29, %s27
        %s489 = smul.u32 4, %s488
        %s490 = smul.u32 2, %s28
        %p491 = scmp.eq.s32.totalorder %s29, 0
        // Predicated region
        $region49: #{wave_unpool.2} parent=39 // pred_check
          %p492 = pneg %p491
        $region50: #{wave_unpool.2} parent=39 // pred_check_branch
          %494 = sbr.rel (%p492) target = $region52
        $region51: #{wave_unpool.2} parent=39 // pred_region
          %v495 = vld [vmem:[%s436] sm:$0xff]
          %v496 = vld [vmem:[%s436 + $0x8] sm:$0xff]
          %v497 = vld [vmem:[%s436 + $0x10] sm:$0xff]
          %v498 = vld [vmem:[%s436 + $0x18] sm:$0xff]
          %v499 = vld [vmem:[%s436 + $0x20] sm:$0xff]
          %v500 = vld [vmem:[%s436 + $0x28] sm:$0xff]
          %v501 = vld [vmem:[%s436 + $0x30] sm:$0xff]
          %v502 = vld [vmem:[%s436 + $0x38] sm:$0xff]
          %v503 = vld [vmem:[#allocation2] sm:$0xff]
          %v504 = vld [vmem:[#allocation2 + $0x8] sm:$0xff]
          %vm505 = vcmask 130048
          %v507 = vsel %vm505, %v495, 0
          %v510 = vsel %vm505, %v496, 0
          %v513 = vsel %vm505, %v497, 0
          %v516 = vsel %vm505, %v498, 0
          %v519 = vsel %vm505, %v499, 0
          %v522 = vsel %vm505, %v500, 0
          %v525 = vsel %vm505, %v501, 0
          %v528 = vsel %vm505, %v502, 0
          %530 = vmatprep.subr.mxu0 0.0
          %531 = vmatpush1.msra.mxu0 %v503
          %532 = vmatprep.subr.mxu0 0.0
          %533 = vmatpush1.msra.mxu0 %v504
          %534 = vmatprep.subr.mxu0 0.0
          %535 = vmatpush1.msra.mxu0 0.0
          %536 = vmatprep.subr.mxu0 0.0
          %537 = vmatpush1.msra.mxu0 0.0
          %538 = vmatprep.subr.mxu0 0.0
          %539 = vmatpush1.msra.mxu0 0.0
          %540 = vmatprep.subr.mxu0 0.0
          %541 = vmatpush1.msra.mxu0 0.0
          %542 = vmatprep.subr.mxu0 0.0
          %543 = vmatpush1.msra.mxu0 0.0
          %544 = vmatprep.subr.mxu0 0.0
          %545 = vmatpush1.msra.mxu0 0.0
          %546 = vmatprep.subr.mxu0 0.0
          %547 = vmatpush1.msra.mxu0 0.0
          %548 = vmatprep.subr.mxu0 0.0
          %549 = vmatpush1.msra.mxu0 0.0
          %550 = vmatprep.subr.mxu0 0.0
          %551 = vmatpush1.msra.mxu0 0.0
          %552 = vmatprep.subr.mxu0 0.0
          %553 = vmatpush1.msra.mxu0 0.0
          %554 = vmatprep.subr.mxu0 0.0
          %555 = vmatpush1.msra.mxu0 0.0
          %556 = vmatprep.subr.mxu0 0.0
          %557 = vmatpush1.msra.mxu0 0.0
          %558 = vmatprep.subr.mxu0 0.0
          %559 = vmatpush1.msra.mxu0 0.0
          %560 = vmatprep.subr.mxu0 0.0
          %561 = vmatpush1.msra.mxu0 0.0
          %562 = vmatprep.subr.mxu0 0.0
          %563 = vmatpush1.msra.mxu0 0.0
          %564 = vmatprep.subr.mxu0 0.0
          %565 = vmatpush1.msra.mxu0 0.0
          %566 = vmatprep.subr.mxu0 0.0
          %567 = vmatpush1.msra.mxu0 0.0
          %568 = vmatprep.subr.mxu0 0.0
          %569 = vmatpush1.msra.mxu0 0.0
          %570 = vmatprep.subr.mxu0 0.0
          %571 = vmatpush1.msra.mxu0 0.0
          %572 = vmatprep.subr.mxu0 0.0
          %573 = vmatpush1.msra.mxu0 0.0
          %574 = vmatprep.subr.mxu0 0.0
          %575 = vmatpush1.msra.mxu0 0.0
          %576 = vmatprep.subr.mxu0 0.0
          %577 = vmatpush1.msra.mxu0 0.0
          %578 = vmatprep.subr.mxu0 0.0
          %579 = vmatpush1.msra.mxu0 0.0
          %580 = vmatprep.subr.mxu0 0.0
          %581 = vmatpush1.msra.mxu0 0.0
          %582 = vmatprep.subr.mxu0 0.0
          %583 = vmatpush1.msra.mxu0 0.0
          %584 = vmatprep.subr.mxu0 0.0
          %585 = vmatpush1.msra.mxu0 0.0
          %586 = vmatprep.subr.mxu0 0.0
          %587 = vmatpush1.msra.mxu0 0.0
          %588 = vmatprep.subr.mxu0 0.0
          %589 = vmatpush1.msra.mxu0 0.0
          %590 = vmatprep.subr.mxu0 0.0
          %591 = vmatpush1.msra.mxu0 0.0
          %592 = vmatprep.subr.mxu0 0.0
          %593 = vmatpush1.msra.mxu0 0.0
          %594 = vmatprep.mubr.f32.mxu0 0.0
          %595 = vmatmul.mubr.f32.gmra.mrb[0].mxu0 %v507
          %v596 = vpop.f32.mrb[0].mxu0
          %v597 = vadd.f32 0.0, %v596
          %v598 = vpop.f32.mrb[0].mxu0
          %599 = vmatprep.mubr.f32.mxu0 0.0
          %600 = vmatmul.mubr.f32.gmra.mrb[0].mxu0 %v510
          %v601 = vpop.f32.mrb[0].mxu0
          %v602 = vadd.f32 0.0, %v601
          %v603 = vpop.f32.mrb[0].mxu0
          %604 = vmatprep.mubr.f32.mxu0 0.0
          %605 = vmatmul.mubr.f32.gmra.mrb[0].mxu0 %v513
          %v606 = vpop.f32.mrb[0].mxu0
          %v607 = vadd.f32 0.0, %v606
          %v608 = vpop.f32.mrb[0].mxu0
          %609 = vmatprep.mubr.f32.mxu0 0.0
          %610 = vmatmul.mubr.f32.gmra.mrb[0].mxu0 %v516
          %v611 = vpop.f32.mrb[0].mxu0
          %v612 = vadd.f32 0.0, %v611
          %v613 = vpop.f32.mrb[0].mxu0
          %614 = vmatprep.mubr.f32.mxu0 0.0
          %615 = vmatmul.mubr.f32.gmra.mrb[0].mxu0 %v519
          %v616 = vpop.f32.mrb[0].mxu0
          %v617 = vadd.f32 0.0, %v616
          %v618 = vpop.f32.mrb[0].mxu0
          %619 = vmatprep.mubr.f32.mxu0 0.0
          %620 = vmatmul.mubr.f32.gmra.mrb[0].mxu0 %v522
          %v621 = vpop.f32.mrb[0].mxu0
          %v622 = vadd.f32 0.0, %v621
          %v623 = vpop.f32.mrb[0].mxu0
          %624 = vmatprep.mubr.f32.mxu0 0.0
          %625 = vmatmul.mubr.f32.gmra.mrb[0].mxu0 %v525
          %v626 = vpop.f32.mrb[0].mxu0
          %v627 = vadd.f32 0.0, %v626
          %v628 = vpop.f32.mrb[0].mxu0
          %629 = vmatprep.mubr.f32.mxu0 0.0
          %630 = vmatmul.mubr.f32.gmra.mrb[0].mxu0 %v528
          %v631 = vpop.f32.mrb[0].mxu0
          %v632 = vadd.f32 0.0, %v631
          %v633 = vpop.f32.mrb[0].mxu0
          %634 = vdwg.mxu0
          %643 = vrot.lane.b32.xlu0 %v597, 32
          %v644 = vpop.permute.xlu0 %643
          %645 = vrot.lane.b32.xlu0 %v602, 32
          %v646 = vpop.permute.xlu0 %645
          %647 = vrot.lane.b32.xlu0 %v607, 32
          %v648 = vpop.permute.xlu0 %647
          %649 = vrot.lane.b32.xlu0 %v612, 32
          %v650 = vpop.permute.xlu0 %649
          %651 = vrot.lane.b32.xlu0 %v617, 32
          %v652 = vpop.permute.xlu0 %651
          %653 = vrot.lane.b32.xlu0 %v622, 32
          %v654 = vpop.permute.xlu0 %653
          %655 = vrot.lane.b32.xlu0 %v627, 32
          %v656 = vpop.permute.xlu0 %655
          %657 = vrot.lane.b32.xlu0 %v632, 32
          %v658 = vpop.permute.xlu0 %657
          %vm667 = vcmask 523520
          %668 = vst.msk [vmem:[%s487] sm:$0xff] %vm667, %v644
          %669 = vst.msk [vmem:[%s487 + $0x8] sm:$0xff] %vm667, %v646
          %670 = vst.msk [vmem:[%s487 + $0x10] sm:$0xff] %vm667, %v648
          %671 = vst.msk [vmem:[%s487 + $0x18] sm:$0xff] %vm667, %v650
          %672 = vst.msk [vmem:[%s487 + $0x20] sm:$0xff] %vm667, %v652
          %673 = vst.msk [vmem:[%s487 + $0x28] sm:$0xff] %vm667, %v654
          %674 = vst.msk [vmem:[%s487 + $0x30] sm:$0xff] %vm667, %v656
          %675 = vst.msk [vmem:[%s487 + $0x38] sm:$0xff] %vm667, %v658
          %vm676 = vcmask 261120
          %677 = vst.msk [vmem:[%s487] sm:$0xff] %vm676, %v597
          %678 = vst.msk [vmem:[%s487 + $0x8] sm:$0xff] %vm676, %v602
          %679 = vst.msk [vmem:[%s487 + $0x10] sm:$0xff] %vm676, %v607
          %680 = vst.msk [vmem:[%s487 + $0x18] sm:$0xff] %vm676, %v612
          %681 = vst.msk [vmem:[%s487 + $0x20] sm:$0xff] %vm676, %v617
          %682 = vst.msk [vmem:[%s487 + $0x28] sm:$0xff] %vm676, %v622
          %683 = vst.msk [vmem:[%s487 + $0x30] sm:$0xff] %vm676, %v627
          %684 = vst.msk [vmem:[%s487 + $0x38] sm:$0xff] %vm676, %v632
        $region52: #{wave_unpool.2} parent=39 // pred_fallthru
          _
        %p685 = scmp.eq.s32.totalorder %s29, 1
        // Predicated region
        $region53: #{wave_unpool.2} parent=39 // pred_check
          %p686 = pneg %p685
        $region54: #{wave_unpool.2} parent=39 // pred_check_branch
          %688 = sbr.rel (%p686) target = $region56
        $region55: #{wave_unpool.2} parent=39 // pred_region
          %v689 = vld [vmem:[%s452] sm:$0xff]
          %v690 = vld [vmem:[%s452 + $0x8] sm:$0xff]
          %v691 = vld [vmem:[%s452 + $0x10] sm:$0xff]
          %v692 = vld [vmem:[%s452 + $0x18] sm:$0xff]
          %v693 = vld [vmem:[%s452 + $0x20] sm:$0xff]
          %v694 = vld [vmem:[%s452 + $0x28] sm:$0xff]
          %v695 = vld [vmem:[%s452 + $0x30] sm:$0xff]
          %v696 = vld [vmem:[%s452 + $0x38] sm:$0xff]
          %s697 = scalar_lea.vmem [#allocation2], 16
          %v698 = vld [vmem:[%s697] sm:$0xff]
          %v699 = vld [vmem:[%s697 + $0x8] sm:$0xff]
          %vm700 = vcmask 130048
          %v702 = vsel %vm700, %v689, 0
          %v705 = vsel %vm700, %v690, 0
          %v708 = vsel %vm700, %v691, 0
          %v711 = vsel %vm700, %v692, 0
          %v714 = vsel %vm700, %v693, 0
          %v717 = vsel %vm700, %v694, 0
          %v720 = vsel %vm700, %v695, 0
          %v723 = vsel %vm700, %v696, 0
          %725 = vmatprep.subr.mxu0 0.0
          %726 = vmatpush1.msra.mxu0 %v698
          %727 = vmatprep.subr.mxu0 0.0
          %728 = vmatpush1.msra.mxu0 %v699
          %729 = vmatprep.subr.mxu0 0.0
          %730 = vmatpush1.msra.mxu0 0.0
          %731 = vmatprep.subr.mxu0 0.0
          %732 = vmatpush1.msra.mxu0 0.0
          %733 = vmatprep.subr.mxu0 0.0
          %734 = vmatpush1.msra.mxu0 0.0
          %735 = vmatprep.subr.mxu0 0.0
          %736 = vmatpush1.msra.mxu0 0.0
          %737 = vmatprep.subr.mxu0 0.0
          %738 = vmatpush1.msra.mxu0 0.0
          %739 = vmatprep.subr.mxu0 0.0
          %740 = vmatpush1.msra.mxu0 0.0
          %741 = vmatprep.subr.mxu0 0.0
          %742 = vmatpush1.msra.mxu0 0.0
          %743 = vmatprep.subr.mxu0 0.0
          %744 = vmatpush1.msra.mxu0 0.0
          %745 = vmatprep.subr.mxu0 0.0
          %746 = vmatpush1.msra.mxu0 0.0
          %747 = vmatprep.subr.mxu0 0.0
          %748 = vmatpush1.msra.mxu0 0.0
          %749 = vmatprep.subr.mxu0 0.0
          %750 = vmatpush1.msra.mxu0 0.0
          %751 = vmatprep.subr.mxu0 0.0
          %752 = vmatpush1.msra.mxu0 0.0
          %753 = vmatprep.subr.mxu0 0.0
          %754 = vmatpush1.msra.mxu0 0.0
          %755 = vmatprep.subr.mxu0 0.0
          %756 = vmatpush1.msra.mxu0 0.0
          %757 = vmatprep.subr.mxu0 0.0
          %758 = vmatpush1.msra.mxu0 0.0
          %759 = vmatprep.subr.mxu0 0.0
          %760 = vmatpush1.msra.mxu0 0.0
          %761 = vmatprep.subr.mxu0 0.0
          %762 = vmatpush1.msra.mxu0 0.0
          %763 = vmatprep.subr.mxu0 0.0
          %764 = vmatpush1.msra.mxu0 0.0
          %765 = vmatprep.subr.mxu0 0.0
          %766 = vmatpush1.msra.mxu0 0.0
          %767 = vmatprep.subr.mxu0 0.0
          %768 = vmatpush1.msra.mxu0 0.0
          %769 = vmatprep.subr.mxu0 0.0
          %770 = vmatpush1.msra.mxu0 0.0
          %771 = vmatprep.subr.mxu0 0.0
          %772 = vmatpush1.msra.mxu0 0.0
          %773 = vmatprep.subr.mxu0 0.0
          %774 = vmatpush1.msra.mxu0 0.0
          %775 = vmatprep.subr.mxu0 0.0
          %776 = vmatpush1.msra.mxu0 0.0
          %777 = vmatprep.subr.mxu0 0.0
          %778 = vmatpush1.msra.mxu0 0.0
          %779 = vmatprep.subr.mxu0 0.0
          %780 = vmatpush1.msra.mxu0 0.0
          %781 = vmatprep.subr.mxu0 0.0
          %782 = vmatpush1.msra.mxu0 0.0
          %783 = vmatprep.subr.mxu0 0.0
          %784 = vmatpush1.msra.mxu0 0.0
          %785 = vmatprep.subr.mxu0 0.0
          %786 = vmatpush1.msra.mxu0 0.0
          %787 = vmatprep.subr.mxu0 0.0
          %788 = vmatpush1.msra.mxu0 0.0
          %789 = vmatprep.mubr.f32.mxu0 0.0
          %790 = vmatmul.mubr.f32.gmra.mrb[0].mxu0 %v702
          %v791 = vpop.f32.mrb[0].mxu0
          %v792 = vadd.f32 0.0, %v791
          %v793 = vpop.f32.mrb[0].mxu0
          %794 = vmatprep.mubr.f32.mxu0 0.0
          %795 = vmatmul.mubr.f32.gmra.mrb[0].mxu0 %v705
          %v796 = vpop.f32.mrb[0].mxu0
          %v797 = vadd.f32 0.0, %v796
          %v798 = vpop.f32.mrb[0].mxu0
          %799 = vmatprep.mubr.f32.mxu0 0.0
          %800 = vmatmul.mubr.f32.gmra.mrb[0].mxu0 %v708
          %v801 = vpop.f32.mrb[0].mxu0
          %v802 = vadd.f32 0.0, %v801
          %v803 = vpop.f32.mrb[0].mxu0
          %804 = vmatprep.mubr.f32.mxu0 0.0
          %805 = vmatmul.mubr.f32.gmra.mrb[0].mxu0 %v711
          %v806 = vpop.f32.mrb[0].mxu0
          %v807 = vadd.f32 0.0, %v806
          %v808 = vpop.f32.mrb[0].mxu0
          %809 = vmatprep.mubr.f32.mxu0 0.0
          %810 = vmatmul.mubr.f32.gmra.mrb[0].mxu0 %v714
          %v811 = vpop.f32.mrb[0].mxu0
          %v812 = vadd.f32 0.0, %v811
          %v813 = vpop.f32.mrb[0].mxu0
          %814 = vmatprep.mubr.f32.mxu0 0.0
          %815 = vmatmul.mubr.f32.gmra.mrb[0].mxu0 %v717
          %v816 = vpop.f32.mrb[0].mxu0
          %v817 = vadd.f32 0.0, %v816
          %v818 = vpop.f32.mrb[0].mxu0
          %819 = vmatprep.mubr.f32.mxu0 0.0
          %820 = vmatmul.mubr.f32.gmra.mrb[0].mxu0 %v720
          %v821 = vpop.f32.mrb[0].mxu0
          %v822 = vadd.f32 0.0, %v821
          %v823 = vpop.f32.mrb[0].mxu0
          %824 = vmatprep.mubr.f32.mxu0 0.0
          %825 = vmatmul.mubr.f32.gmra.mrb[0].mxu0 %v723
          %v826 = vpop.f32.mrb[0].mxu0
          %v827 = vadd.f32 0.0, %v826
          %v828 = vpop.f32.mrb[0].mxu0
          %829 = vdwg.mxu0
          %838 = vrot.lane.b32.xlu0 %v792, 32
          %v839 = vpop.permute.xlu0 %838
          %840 = vrot.lane.b32.xlu0 %v797, 32
          %v841 = vpop.permute.xlu0 %840
          %842 = vrot.lane.b32.xlu0 %v802, 32
          %v843 = vpop.permute.xlu0 %842
          %844 = vrot.lane.b32.xlu0 %v807, 32
          %v845 = vpop.permute.xlu0 %844
          %846 = vrot.lane.b32.xlu0 %v812, 32
          %v847 = vpop.permute.xlu0 %846
          %848 = vrot.lane.b32.xlu0 %v817, 32
          %v849 = vpop.permute.xlu0 %848
          %850 = vrot.lane.b32.xlu0 %v822, 32
          %v851 = vpop.permute.xlu0 %850
          %852 = vrot.lane.b32.xlu0 %v827, 32
          %v853 = vpop.permute.xlu0 %852
          %vm862 = vcmask 523520
          %863 = vst.msk [vmem:[%s487] sm:$0xff] %vm862, %v839
          %864 = vst.msk [vmem:[%s487 + $0x8] sm:$0xff] %vm862, %v841
          %865 = vst.msk [vmem:[%s487 + $0x10] sm:$0xff] %vm862, %v843
          %866 = vst.msk [vmem:[%s487 + $0x18] sm:$0xff] %vm862, %v845
          %867 = vst.msk [vmem:[%s487 + $0x20] sm:$0xff] %vm862, %v847
          %868 = vst.msk [vmem:[%s487 + $0x28] sm:$0xff] %vm862, %v849
          %869 = vst.msk [vmem:[%s487 + $0x30] sm:$0xff] %vm862, %v851
          %870 = vst.msk [vmem:[%s487 + $0x38] sm:$0xff] %vm862, %v853
          %vm871 = vcmask 261120
          %872 = vst.msk [vmem:[%s487] sm:$0xff] %vm871, %v792
          %873 = vst.msk [vmem:[%s487 + $0x8] sm:$0xff] %vm871, %v797
          %874 = vst.msk [vmem:[%s487 + $0x10] sm:$0xff] %vm871, %v802
          %875 = vst.msk [vmem:[%s487 + $0x18] sm:$0xff] %vm871, %v807
          %876 = vst.msk [vmem:[%s487 + $0x20] sm:$0xff] %vm871, %v812
          %877 = vst.msk [vmem:[%s487 + $0x28] sm:$0xff] %vm871, %v817
          %878 = vst.msk [vmem:[%s487 + $0x30] sm:$0xff] %vm871, %v822
          %879 = vst.msk [vmem:[%s487 + $0x38] sm:$0xff] %vm871, %v827
        $region56: #{wave_unpool.2} parent=39 // pred_fallthru
          _
        %p880 = scmp.eq.s32.totalorder %s29, 2
        // Predicated region
        $region57: #{wave_unpool.2} parent=39 // pred_check
          %p881 = pneg %p880
        $region58: #{wave_unpool.2} parent=39 // pred_check_branch
          %883 = sbr.rel (%p881) target = $region60
        $region59: #{wave_unpool.2} parent=39 // pred_region
          %v884 = vld [vmem:[%s468] sm:$0xff]
          %v885 = vld [vmem:[%s468 + $0x8] sm:$0xff]
          %v886 = vld [vmem:[%s468 + $0x10] sm:$0xff]
          %v887 = vld [vmem:[%s468 + $0x18] sm:$0xff]
          %v888 = vld [vmem:[%s468 + $0x20] sm:$0xff]
          %v889 = vld [vmem:[%s468 + $0x28] sm:$0xff]
          %v890 = vld [vmem:[%s468 + $0x30] sm:$0xff]
          %v891 = vld [vmem:[%s468 + $0x38] sm:$0xff]
          %v892 = vld [vmem:[#allocation2] sm:$0xff]
          %v893 = vld [vmem:[#allocation2 + $0x8] sm:$0xff]
          %vm894 = vcmask 130048
          %v896 = vsel %vm894, %v884, 0
          %v899 = vsel %vm894, %v885, 0
          %v902 = vsel %vm894, %v886, 0
          %v905 = vsel %vm894, %v887, 0
          %v908 = vsel %vm894, %v888, 0
          %v911 = vsel %vm894, %v889, 0
          %v914 = vsel %vm894, %v890, 0
          %v917 = vsel %vm894, %v891, 0
          %919 = vmatprep.subr.mxu0 0.0
          %920 = vmatpush1.msra.mxu0 %v892
          %921 = vmatprep.subr.mxu0 0.0
          %922 = vmatpush1.msra.mxu0 %v893
          %923 = vmatprep.subr.mxu0 0.0
          %924 = vmatpush1.msra.mxu0 0.0
          %925 = vmatprep.subr.mxu0 0.0
          %926 = vmatpush1.msra.mxu0 0.0
          %927 = vmatprep.subr.mxu0 0.0
          %928 = vmatpush1.msra.mxu0 0.0
          %929 = vmatprep.subr.mxu0 0.0
          %930 = vmatpush1.msra.mxu0 0.0
          %931 = vmatprep.subr.mxu0 0.0
          %932 = vmatpush1.msra.mxu0 0.0
          %933 = vmatprep.subr.mxu0 0.0
          %934 = vmatpush1.msra.mxu0 0.0
          %935 = vmatprep.subr.mxu0 0.0
          %936 = vmatpush1.msra.mxu0 0.0
          %937 = vmatprep.subr.mxu0 0.0
          %938 = vmatpush1.msra.mxu0 0.0
          %939 = vmatprep.subr.mxu0 0.0
          %940 = vmatpush1.msra.mxu0 0.0
          %941 = vmatprep.subr.mxu0 0.0
          %942 = vmatpush1.msra.mxu0 0.0
          %943 = vmatprep.subr.mxu0 0.0
          %944 = vmatpush1.msra.mxu0 0.0
          %945 = vmatprep.subr.mxu0 0.0
          %946 = vmatpush1.msra.mxu0 0.0
          %947 = vmatprep.subr.mxu0 0.0
          %948 = vmatpush1.msra.mxu0 0.0
          %949 = vmatprep.subr.mxu0 0.0
          %950 = vmatpush1.msra.mxu0 0.0
          %951 = vmatprep.subr.mxu0 0.0
          %952 = vmatpush1.msra.mxu0 0.0
          %953 = vmatprep.subr.mxu0 0.0
          %954 = vmatpush1.msra.mxu0 0.0
          %955 = vmatprep.subr.mxu0 0.0
          %956 = vmatpush1.msra.mxu0 0.0
          %957 = vmatprep.subr.mxu0 0.0
          %958 = vmatpush1.msra.mxu0 0.0
          %959 = vmatprep.subr.mxu0 0.0
          %960 = vmatpush1.msra.mxu0 0.0
          %961 = vmatprep.subr.mxu0 0.0
          %962 = vmatpush1.msra.mxu0 0.0
          %963 = vmatprep.subr.mxu0 0.0
          %964 = vmatpush1.msra.mxu0 0.0
          %965 = vmatprep.subr.mxu0 0.0
          %966 = vmatpush1.msra.mxu0 0.0
          %967 = vmatprep.subr.mxu0 0.0
          %968 = vmatpush1.msra.mxu0 0.0
          %969 = vmatprep.subr.mxu0 0.0
          %970 = vmatpush1.msra.mxu0 0.0
          %971 = vmatprep.subr.mxu0 0.0
          %972 = vmatpush1.msra.mxu0 0.0
          %973 = vmatprep.subr.mxu0 0.0
          %974 = vmatpush1.msra.mxu0 0.0
          %975 = vmatprep.subr.mxu0 0.0
          %976 = vmatpush1.msra.mxu0 0.0
          %977 = vmatprep.subr.mxu0 0.0
          %978 = vmatpush1.msra.mxu0 0.0
          %979 = vmatprep.subr.mxu0 0.0
          %980 = vmatpush1.msra.mxu0 0.0
          %981 = vmatprep.subr.mxu0 0.0
          %982 = vmatpush1.msra.mxu0 0.0
          %983 = vmatprep.mubr.f32.mxu0 0.0
          %984 = vmatmul.mubr.f32.gmra.mrb[0].mxu0 %v896
          %v985 = vpop.f32.mrb[0].mxu0
          %v986 = vadd.f32 0.0, %v985
          %v987 = vpop.f32.mrb[0].mxu0
          %988 = vmatprep.mubr.f32.mxu0 0.0
          %989 = vmatmul.mubr.f32.gmra.mrb[0].mxu0 %v899
          %v990 = vpop.f32.mrb[0].mxu0
          %v991 = vadd.f32 0.0, %v990
          %v992 = vpop.f32.mrb[0].mxu0
          %993 = vmatprep.mubr.f32.mxu0 0.0
          %994 = vmatmul.mubr.f32.gmra.mrb[0].mxu0 %v902
          %v995 = vpop.f32.mrb[0].mxu0
          %v996 = vadd.f32 0.0, %v995
          %v997 = vpop.f32.mrb[0].mxu0
          %998 = vmatprep.mubr.f32.mxu0 0.0
          %999 = vmatmul.mubr.f32.gmra.mrb[0].mxu0 %v905
          %v1000 = vpop.f32.mrb[0].mxu0
          %v1001 = vadd.f32 0.0, %v1000
          %v1002 = vpop.f32.mrb[0].mxu0
          %1003 = vmatprep.mubr.f32.mxu0 0.0
          %1004 = vmatmul.mubr.f32.gmra.mrb[0].mxu0 %v908
          %v1005 = vpop.f32.mrb[0].mxu0
          %v1006 = vadd.f32 0.0, %v1005
          %v1007 = vpop.f32.mrb[0].mxu0
          %1008 = vmatprep.mubr.f32.mxu0 0.0
          %1009 = vmatmul.mubr.f32.gmra.mrb[0].mxu0 %v911
          %v1010 = vpop.f32.mrb[0].mxu0
          %v1011 = vadd.f32 0.0, %v1010
          %v1012 = vpop.f32.mrb[0].mxu0
          %1013 = vmatprep.mubr.f32.mxu0 0.0
          %1014 = vmatmul.mubr.f32.gmra.mrb[0].mxu0 %v914
          %v1015 = vpop.f32.mrb[0].mxu0
          %v1016 = vadd.f32 0.0, %v1015
          %v1017 = vpop.f32.mrb[0].mxu0
          %1018 = vmatprep.mubr.f32.mxu0 0.0
          %1019 = vmatmul.mubr.f32.gmra.mrb[0].mxu0 %v917
          %v1020 = vpop.f32.mrb[0].mxu0
          %v1021 = vadd.f32 0.0, %v1020
          %v1022 = vpop.f32.mrb[0].mxu0
          %1023 = vdwg.mxu0
          %1032 = vrot.lane.b32.xlu0 %v986, 32
          %v1033 = vpop.permute.xlu0 %1032
          %1034 = vrot.lane.b32.xlu0 %v991, 32
          %v1035 = vpop.permute.xlu0 %1034
          %1036 = vrot.lane.b32.xlu0 %v996, 32
          %v1037 = vpop.permute.xlu0 %1036
          %1038 = vrot.lane.b32.xlu0 %v1001, 32
          %v1039 = vpop.permute.xlu0 %1038
          %1040 = vrot.lane.b32.xlu0 %v1006, 32
          %v1041 = vpop.permute.xlu0 %1040
          %1042 = vrot.lane.b32.xlu0 %v1011, 32
          %v1043 = vpop.permute.xlu0 %1042
          %1044 = vrot.lane.b32.xlu0 %v1016, 32
          %v1045 = vpop.permute.xlu0 %1044
          %1046 = vrot.lane.b32.xlu0 %v1021, 32
          %v1047 = vpop.permute.xlu0 %1046
          %vm1056 = vcmask 523520
          %1057 = vst.msk [vmem:[%s487] sm:$0xff] %vm1056, %v1033
          %1058 = vst.msk [vmem:[%s487 + $0x8] sm:$0xff] %vm1056, %v1035
          %1059 = vst.msk [vmem:[%s487 + $0x10] sm:$0xff] %vm1056, %v1037
          %1060 = vst.msk [vmem:[%s487 + $0x18] sm:$0xff] %vm1056, %v1039
          %1061 = vst.msk [vmem:[%s487 + $0x20] sm:$0xff] %vm1056, %v1041
          %1062 = vst.msk [vmem:[%s487 + $0x28] sm:$0xff] %vm1056, %v1043
          %1063 = vst.msk [vmem:[%s487 + $0x30] sm:$0xff] %vm1056, %v1045
          %1064 = vst.msk [vmem:[%s487 + $0x38] sm:$0xff] %vm1056, %v1047
          %v1065 = vmul.f32 %v986, -1.0
          %v1066 = vmul.f32 %v991, -1.0
          %v1067 = vmul.f32 %v996, -1.0
          %v1068 = vmul.f32 %v1001, -1.0
          %v1069 = vmul.f32 %v1006, -1.0
          %v1070 = vmul.f32 %v1011, -1.0
          %v1071 = vmul.f32 %v1016, -1.0
          %v1072 = vmul.f32 %v1021, -1.0
          %vm1073 = vcmask 261120
          %1074 = vst.msk [vmem:[%s487] sm:$0xff] %vm1073, %v1065
          %1075 = vst.msk [vmem:[%s487 + $0x8] sm:$0xff] %vm1073, %v1066
          %1076 = vst.msk [vmem:[%s487 + $0x10] sm:$0xff] %vm1073, %v1067
          %1077 = vst.msk [vmem:[%s487 + $0x18] sm:$0xff] %vm1073, %v1068
          %1078 = vst.msk [vmem:[%s487 + $0x20] sm:$0xff] %vm1073, %v1069
          %1079 = vst.msk [vmem:[%s487 + $0x28] sm:$0xff] %vm1073, %v1070
          %1080 = vst.msk [vmem:[%s487 + $0x30] sm:$0xff] %vm1073, %v1071
          %1081 = vst.msk [vmem:[%s487 + $0x38] sm:$0xff] %vm1073, %v1072
        $region60: #{wave_unpool.2} parent=39 // pred_fallthru
          _
        %p1082 = scmp.eq.s32.totalorder %s29, 3
        // Predicated region
        $region61: #{wave_unpool.2} parent=39 // pred_check
          %p1083 = pneg %p1082
        $region62: #{wave_unpool.2} parent=39 // pred_check_branch
          %1085 = sbr.rel (%p1083) target = $region64
        $region63: #{wave_unpool.2} parent=39 // pred_region
          %v1086 = vld [vmem:[%s344] sm:$0xff]
          %v1087 = vld [vmem:[%s344 + $0x8] sm:$0xff]
          %v1088 = vld [vmem:[%s344 + $0x10] sm:$0xff]
          %v1089 = vld [vmem:[%s344 + $0x18] sm:$0xff]
          %v1090 = vld [vmem:[%s344 + $0x20] sm:$0xff]
          %v1091 = vld [vmem:[%s344 + $0x28] sm:$0xff]
          %v1092 = vld [vmem:[%s344 + $0x30] sm:$0xff]
          %v1093 = vld [vmem:[%s344 + $0x38] sm:$0xff]
          %s1094 = scalar_lea.vmem [#allocation2], 16
          %v1095 = vld [vmem:[%s1094] sm:$0xff]
          %v1096 = vld [vmem:[%s1094 + $0x8] sm:$0xff]
          %vm1097 = vcmask 130048
          %v1099 = vsel %vm1097, %v1086, 0
          %v1102 = vsel %vm1097, %v1087, 0
          %v1105 = vsel %vm1097, %v1088, 0
          %v1108 = vsel %vm1097, %v1089, 0
          %v1111 = vsel %vm1097, %v1090, 0
          %v1114 = vsel %vm1097, %v1091, 0
          %v1117 = vsel %vm1097, %v1092, 0
          %v1120 = vsel %vm1097, %v1093, 0
          %1122 = vmatprep.subr.mxu0 0.0
          %1123 = vmatpush1.msra.mxu0 %v1095
          %1124 = vmatprep.subr.mxu0 0.0
          %1125 = vmatpush1.msra.mxu0 %v1096
          %1126 = vmatprep.subr.mxu0 0.0
          %1127 = vmatpush1.msra.mxu0 0.0
          %1128 = vmatprep.subr.mxu0 0.0
          %1129 = vmatpush1.msra.mxu0 0.0
          %1130 = vmatprep.subr.mxu0 0.0
          %1131 = vmatpush1.msra.mxu0 0.0
          %1132 = vmatprep.subr.mxu0 0.0
          %1133 = vmatpush1.msra.mxu0 0.0
          %1134 = vmatprep.subr.mxu0 0.0
          %1135 = vmatpush1.msra.mxu0 0.0
          %1136 = vmatprep.subr.mxu0 0.0
          %1137 = vmatpush1.msra.mxu0 0.0
          %1138 = vmatprep.subr.mxu0 0.0
          %1139 = vmatpush1.msra.mxu0 0.0
          %1140 = vmatprep.subr.mxu0 0.0
          %1141 = vmatpush1.msra.mxu0 0.0
          %1142 = vmatprep.subr.mxu0 0.0
          %1143 = vmatpush1.msra.mxu0 0.0
          %1144 = vmatprep.subr.mxu0 0.0
          %1145 = vmatpush1.msra.mxu0 0.0
          %1146 = vmatprep.subr.mxu0 0.0
          %1147 = vmatpush1.msra.mxu0 0.0
          %1148 = vmatprep.subr.mxu0 0.0
          %1149 = vmatpush1.msra.mxu0 0.0
          %1150 = vmatprep.subr.mxu0 0.0
          %1151 = vmatpush1.msra.mxu0 0.0
          %1152 = vmatprep.subr.mxu0 0.0
          %1153 = vmatpush1.msra.mxu0 0.0
          %1154 = vmatprep.subr.mxu0 0.0
          %1155 = vmatpush1.msra.mxu0 0.0
          %1156 = vmatprep.subr.mxu0 0.0
          %1157 = vmatpush1.msra.mxu0 0.0
          %1158 = vmatprep.subr.mxu0 0.0
          %1159 = vmatpush1.msra.mxu0 0.0
          %1160 = vmatprep.subr.mxu0 0.0
          %1161 = vmatpush1.msra.mxu0 0.0
          %1162 = vmatprep.subr.mxu0 0.0
          %1163 = vmatpush1.msra.mxu0 0.0
          %1164 = vmatprep.subr.mxu0 0.0
          %1165 = vmatpush1.msra.mxu0 0.0
          %1166 = vmatprep.subr.mxu0 0.0
          %1167 = vmatpush1.msra.mxu0 0.0
          %1168 = vmatprep.subr.mxu0 0.0
          %1169 = vmatpush1.msra.mxu0 0.0
          %1170 = vmatprep.subr.mxu0 0.0
          %1171 = vmatpush1.msra.mxu0 0.0
          %1172 = vmatprep.subr.mxu0 0.0
          %1173 = vmatpush1.msra.mxu0 0.0
          %1174 = vmatprep.subr.mxu0 0.0
          %1175 = vmatpush1.msra.mxu0 0.0
          %1176 = vmatprep.subr.mxu0 0.0
          %1177 = vmatpush1.msra.mxu0 0.0
          %1178 = vmatprep.subr.mxu0 0.0
          %1179 = vmatpush1.msra.mxu0 0.0
          %1180 = vmatprep.subr.mxu0 0.0
          %1181 = vmatpush1.msra.mxu0 0.0
          %1182 = vmatprep.subr.mxu0 0.0
          %1183 = vmatpush1.msra.mxu0 0.0
          %1184 = vmatprep.subr.mxu0 0.0
          %1185 = vmatpush1.msra.mxu0 0.0
          %1186 = vmatprep.mubr.f32.mxu0 0.0
          %1187 = vmatmul.mubr.f32.gmra.mrb[0].mxu0 %v1099
          %v1188 = vpop.f32.mrb[0].mxu0
          %v1189 = vadd.f32 0.0, %v1188
          %v1190 = vpop.f32.mrb[0].mxu0
          %1191 = vmatprep.mubr.f32.mxu0 0.0
          %1192 = vmatmul.mubr.f32.gmra.mrb[0].mxu0 %v1102
          %v1193 = vpop.f32.mrb[0].mxu0
          %v1194 = vadd.f32 0.0, %v1193
          %v1195 = vpop.f32.mrb[0].mxu0
          %1196 = vmatprep.mubr.f32.mxu0 0.0
          %1197 = vmatmul.mubr.f32.gmra.mrb[0].mxu0 %v1105
          %v1198 = vpop.f32.mrb[0].mxu0
          %v1199 = vadd.f32 0.0, %v1198
          %v1200 = vpop.f32.mrb[0].mxu0
          %1201 = vmatprep.mubr.f32.mxu0 0.0
          %1202 = vmatmul.mubr.f32.gmra.mrb[0].mxu0 %v1108
          %v1203 = vpop.f32.mrb[0].mxu0
          %v1204 = vadd.f32 0.0, %v1203
          %v1205 = vpop.f32.mrb[0].mxu0
          %1206 = vmatprep.mubr.f32.mxu0 0.0
          %1207 = vmatmul.mubr.f32.gmra.mrb[0].mxu0 %v1111
          %v1208 = vpop.f32.mrb[0].mxu0
          %v1209 = vadd.f32 0.0, %v1208
          %v1210 = vpop.f32.mrb[0].mxu0
          %1211 = vmatprep.mubr.f32.mxu0 0.0
          %1212 = vmatmul.mubr.f32.gmra.mrb[0].mxu0 %v1114
          %v1213 = vpop.f32.mrb[0].mxu0
          %v1214 = vadd.f32 0.0, %v1213
          %v1215 = vpop.f32.mrb[0].mxu0
          %1216 = vmatprep.mubr.f32.mxu0 0.0
          %1217 = vmatmul.mubr.f32.gmra.mrb[0].mxu0 %v1117
          %v1218 = vpop.f32.mrb[0].mxu0
          %v1219 = vadd.f32 0.0, %v1218
          %v1220 = vpop.f32.mrb[0].mxu0
          %1221 = vmatprep.mubr.f32.mxu0 0.0
          %1222 = vmatmul.mubr.f32.gmra.mrb[0].mxu0 %v1120
          %v1223 = vpop.f32.mrb[0].mxu0
          %v1224 = vadd.f32 0.0, %v1223
          %v1225 = vpop.f32.mrb[0].mxu0
          %1226 = vdwg.mxu0
          %1235 = vrot.lane.b32.xlu0 %v1189, 32
          %v1236 = vpop.permute.xlu0 %1235
          %1237 = vrot.lane.b32.xlu0 %v1194, 32
          %v1238 = vpop.permute.xlu0 %1237
          %1239 = vrot.lane.b32.xlu0 %v1199, 32
          %v1240 = vpop.permute.xlu0 %1239
          %1241 = vrot.lane.b32.xlu0 %v1204, 32
          %v1242 = vpop.permute.xlu0 %1241
          %1243 = vrot.lane.b32.xlu0 %v1209, 32
          %v1244 = vpop.permute.xlu0 %1243
          %1245 = vrot.lane.b32.xlu0 %v1214, 32
          %v1246 = vpop.permute.xlu0 %1245
          %1247 = vrot.lane.b32.xlu0 %v1219, 32
          %v1248 = vpop.permute.xlu0 %1247
          %1249 = vrot.lane.b32.xlu0 %v1224, 32
          %v1250 = vpop.permute.xlu0 %1249
          %vm1259 = vcmask 523520
          %1260 = vst.msk [vmem:[%s487] sm:$0xff] %vm1259, %v1236
          %1261 = vst.msk [vmem:[%s487 + $0x8] sm:$0xff] %vm1259, %v1238
          %1262 = vst.msk [vmem:[%s487 + $0x10] sm:$0xff] %vm1259, %v1240
          %1263 = vst.msk [vmem:[%s487 + $0x18] sm:$0xff] %vm1259, %v1242
          %1264 = vst.msk [vmem:[%s487 + $0x20] sm:$0xff] %vm1259, %v1244
          %1265 = vst.msk [vmem:[%s487 + $0x28] sm:$0xff] %vm1259, %v1246
          %1266 = vst.msk [vmem:[%s487 + $0x30] sm:$0xff] %vm1259, %v1248
          %1267 = vst.msk [vmem:[%s487 + $0x38] sm:$0xff] %vm1259, %v1250
          %v1268 = vmul.f32 %v1189, -1.0
          %v1269 = vmul.f32 %v1194, -1.0
          %v1270 = vmul.f32 %v1199, -1.0
          %v1271 = vmul.f32 %v1204, -1.0
          %v1272 = vmul.f32 %v1209, -1.0
          %v1273 = vmul.f32 %v1214, -1.0
          %v1274 = vmul.f32 %v1219, -1.0
          %v1275 = vmul.f32 %v1224, -1.0
          %vm1276 = vcmask 261120
          %1277 = vst.msk [vmem:[%s487] sm:$0xff] %vm1276, %v1268
          %1278 = vst.msk [vmem:[%s487 + $0x8] sm:$0xff] %vm1276, %v1269
          %1279 = vst.msk [vmem:[%s487 + $0x10] sm:$0xff] %vm1276, %v1270
          %1280 = vst.msk [vmem:[%s487 + $0x18] sm:$0xff] %vm1276, %v1271
          %1281 = vst.msk [vmem:[%s487 + $0x20] sm:$0xff] %vm1276, %v1272
          %1282 = vst.msk [vmem:[%s487 + $0x28] sm:$0xff] %vm1276, %v1273
          %1283 = vst.msk [vmem:[%s487 + $0x30] sm:$0xff] %vm1276, %v1274
          %1284 = vst.msk [vmem:[%s487 + $0x38] sm:$0xff] %vm1276, %v1275
        $region64: #{wave_unpool.2} parent=39 // pred_fallthru
          _
        %s1285 = sadd.s32 %s29, %s27
        %s1286 = smul.u32 4, %s1285
        %s1287 = smul.u32 2, %s28
        %p1288 = scmp.lt.s32.totalorder %s26, 1
        %s1289 = scalar_select %p1288, %s26, 1
        %p1290 = scmp.lt.s32.totalorder %s1286, 19
        %s1291 = scalar_select %p1290, %s1286, 19
        %p1292 = scmp.lt.s32.totalorder %s1287, 1
        %s1293 = scalar_select %p1292, %s1287, 1
        %s1294 = smul.addr %s1291, 2
        %s1295 = sadd.s32 %s1293, %s1294
        %s1296 = smul.addr %s1289, 40
        %s1297 = sadd.s32 %s1295, %s1296
        %s1298 = smul.addr %s1297, 8
        %s1299 = scalar_lea.vmem %s5, %s1298
        // Predicated region
        $region65: #{wave_unpool.2} parent=39 // pred_check
          %p1300 = pneg %p211
        $region66: #{wave_unpool.2} parent=39 // pred_check_branch
          %1302 = sbr.rel (%p1300) target = $region68
        $region67: #{wave_unpool.2} parent=39 // pred_region
          %s1303 = sadd.s32 %s29, %s27
          %s1304 = smul.u32 4, %s1303
          %s1305 = smul.u32 2, %s28
        $region68: #{wave_unpool.2} parent=39 // pred_fallthru
          _
      $region40: #{wave_unpool.2} parent=5 // pred_fallthru
        _
      %p1306 = scmp.le.s32.totalorder 2, %s15
      // Predicated region
      $region69: #{wave_unpool.2} parent=5 // pred_check
        %p1307 = pneg %p1306
      $region70: #{wave_unpool.2} parent=5 // pred_check_branch
        %1309 = sbr.rel (%p1307) target = $region72
      $region71: #{wave_unpool.2} parent=5 // pred_region
        %s1310 = ssub.s32 %s15, 2
        // Predicated region
        $region73: #{wave_unpool.2} parent=71 // pred_check
          %p1311 = pneg %p217
        $region74: #{wave_unpool.2} parent=71 // pred_check_branch
          %1313 = sbr.rel (%p1311) target = $region76
        $region75: #{wave_unpool.2} parent=71 // pred_region
          %s1314 = sadd.s32 %s33, %s31
          %s1315 = smul.u32 4, %s1314
          %s1316 = smul.u32 2, %s32
          %p1317 = scmp.lt.s32.totalorder %s30, 1
          %s1318 = scalar_select %p1317, %s30, 1
          %p1319 = scmp.lt.s32.totalorder %s1315, 19
          %s1320 = scalar_select %p1319, %s1315, 19
          %p1321 = scmp.lt.s32.totalorder %s1316, 1
          %s1322 = scalar_select %p1321, %s1316, 1
          %s1323 = smul.addr %s1320, 2
          %s1324 = sadd.s32 %s1322, %s1323
          %s1325 = smul.addr %s1318, 40
          %s1326 = sadd.s32 %s1324, %s1325
          %s1327 = smul.addr %s1326, 8
          %s1328 = scalar_lea.vmem %s5, %s1327
        $region76: #{wave_unpool.2} parent=71 // pred_fallthru
          _
      $region72: #{wave_unpool.2} parent=5 // pred_fallthru
        _
    $region6: #{wave_unpool.2} parent=1 // loop_footer
      %s19 = sadd.s32 1, %s15
    $region7: #{wave_unpool.2} parent=1 // loop_footer_branch
      %14 = sbr.rel target = $region3
    $region8: #{wave_unpool.2} parent=1 // loop_exit
      _
    %1329 = vsyncpa [#allocation3], 1
    %s1330 = scalar_lea.sflag [#allocation3], 1
    %1331 = vsyncpa %s1330, 1
    %1332 = vsyncpa [#allocation5], 1
    %s1333 = scalar_lea.sflag [#allocation5], 1
    %1334 = vsyncpa %s1333, 1

</llo_original>
